<compile_context>
chip_gen: v7x
topology: tpu7x:2x2x1
jax: 0.10.0
libtpu: 0.0.40
codegen_flags: <defaults>
</compile_context>

<pallas_src>
import functools
import math

import jax
import jax.numpy as jnp
from jax.experimental import pallas as pl
from jax.experimental.pallas import tpu as pltpu


# ---------------------------------------------------------------------------
# Pallas kernel
# ---------------------------------------------------------------------------

def wavenet_kernel(x_ref, w_in_ref, b_in_ref, wt_ref, bt_ref, ws_ref, bs_ref,
                   rw_ref, rb_ref, wmix_ref, bmix_ref, o_ref, *,
                   dilations, kernel_size, cp, blk_b, halo, t_tile):
    """One (batch-block, T-tile) slab per grid step; time (and batch) on lanes.

    x_ref    : (1, 1, 1, blk_b*(halo+t_tile))  packed waveform slab
    w_in_ref : (CP, 1)        b_in_ref : (CP, 1)        input 1x1 conv
    wt_ref   : (L, CP, K*CP)  bt_ref   : (L, CP, 1)     tanh-half dilated conv
    ws_ref   : (L, CP, K*CP)  bs_ref   : (L, CP, 1)     sigmoid-half dilated conv
    rw_ref   : (L, CP, CP)    rb_ref   : (L, CP, 1)     1x1 residual convs
    wmix_ref : (L, CP, 1)     bmix_ref : (1, 1)         folded linear_mix
    o_ref    : (1, 1, 1, blk_b*t_tile)
    """
    K = kernel_size
    W = halo + t_tile                       # per-batch-segment slab width
    N = blk_b * W                           # lane extent of the packed slab
    x = x_ref[0, 0]                         # (1, N) raw waveform, time on lanes

    # Pre-signal mask: zero each layer's activations at global time < 0
    # (exactly PyTorch's per-layer causal zero padding).  One hoisted iota +
    # one select per layer; a no-op on interior T tiles.
    ti = pl.program_id(1)
    col = jax.lax.broadcasted_iota(jnp.int32, (cp, N), 1)
    seg_col = col % W                       # column index within each batch segment
    thr = halo - ti * t_tile                # columns < thr are global time < 0
    valid = seg_col >= thr                  # (cp, N) bool

    # input_layer: CausalConv1d(1, C, kernel_size=1) == broadcast mul-add (VPU).
    out = jnp.where(valid, w_in_ref[...] * x + b_in_ref[...], 0.0)     # (CP, N)

    mix_acc = jnp.zeros((cp, N), jnp.float32)   # folded linear_mix accumulator

    # TODO(synk): for deep dilation stacks (10-30 layers) switch this static
    # unroll to lax.fori_loop with an SMEM shift table to bound live ranges.
    for l, d in enumerate(dilations):
        x_in = out
        # Stack the K causally-shifted taps along sublanes: (K*CP, N).
        # Roll wrap-around bleeds only into the (discarded) halo columns.
        taps = []
        for k in range(K):
            s = (K - 1 - k) * d
            taps.append(x_in if s == 0 else pltpu.roll(x_in, shift=s, axis=1))
        xs = jnp.concatenate(taps, axis=0)                              # (K*CP, N)

        # One MXU dot per gate half (weights pre-stacked over taps).
        acc_t = jnp.dot(wt_ref[l], xs,
                        preferred_element_type=jnp.float32) + bt_ref[l]   # (CP, N)
        acc_s = jnp.dot(ws_ref[l], xs,
                        preferred_element_type=jnp.float32) + bs_ref[l]   # (CP, N)

        # gated = tanh(.) * sigmoid(.); sigmoid via one EUP tanh.
        gated = jnp.tanh(acc_t) * (0.5 * jnp.tanh(0.5 * acc_s) + 0.5)     # (CP, N)

        # linear_mix folded into the layer loop (replaces concat + big matmul).
        mix_acc = mix_acc + wmix_ref[l] * gated

        # residual 1x1 conv + skip connection; re-zero pre-signal columns.
        out = (jnp.dot(rw_ref[l], gated, preferred_element_type=jnp.float32)
               + rb_ref[l] + x_in)
        out = jnp.where(valid, out, 0.0)

    mix = jnp.sum(mix_acc, axis=0, keepdims=True) + bmix_ref[...]        # (1, N)

    # Drop each batch segment's halo; store one wide lane-dense row.
    pieces = [mix[:, b * W + halo:(b + 1) * W] for b in range(blk_b)]
    o_ref[0, 0] = jnp.concatenate(pieces, axis=1).astype(o_ref.dtype)


# ---------------------------------------------------------------------------
# Wrapper (takes PyTorch Conv1d-layout weights, repacks for the kernel)
# ---------------------------------------------------------------------------

def wavenet_forward(x_ncl, params, dilations, num_channels, kernel_size=3,
                    t_tile=128, blk_b_target=8):
    """x_ncl: (B, 1, T) like the PyTorch module. Returns (B, 1, T) float32."""
    B, cin, T = x_ncl.shape
    assert cin == 1
    C = num_channels
    CP = 8                                   # channels padded to one f32 sublane tile
    L = len(dilations)
    K = kernel_size
    f32 = jnp.float32

    # ---- causal-halo / T-tiling geometry ------------------------------------
    rfield = (K - 1) * int(sum(int(d) for d in dilations))   # receptive field - 1
    halo = 0 if rfield == 0 else (-(-rfield // 128)) * 128   # round up to lane tiles
    t_round = (-(-T // t_tile)) * t_tile
    n_tiles = t_round // t_tile
    W = halo + t_tile
    blk_b = math.gcd(B, blk_b_target)        # batch elements packed per grid step
    n_bblk = B // blk_b

    # ---- repack PyTorch Conv1d weights (zero-pad C -> CP, stack taps) --------
    def padc(a, axis):
        pad = [(0, 0)] * a.ndim
        pad[axis] = (0, CP - a.shape[axis])
        return jnp.pad(a, pad)

    w_in = padc(params["input_w"].reshape(C, 1).astype(f32), 0)          # (CP, 1)
    b_in = padc(params["input_b"].reshape(C, 1).astype(f32), 0)          # (CP, 1)

    hw = padc(params["hidden_w"].astype(f32), 2)                         # (L, 2C, CP, K)
    hw = jnp.transpose(hw, (0, 1, 3, 2)).reshape(L, 2 * C, K * CP)       # (L, 2C, K*CP)
    wt = padc(hw[:, :C], 1)                                              # (L, CP, K*CP)
    ws = padc(hw[:, C:], 1)                                              # (L, CP, K*CP)
    hb = params["hidden_b"].astype(f32)                                  # (L, 2C)
    bt = padc(hb[:, :C, None], 1)                                        # (L, CP, 1)
    bs = padc(hb[:, C:, None], 1)                                        # (L, CP, 1)

    rw = padc(padc(params["res_w"][..., 0].astype(f32), 1), 2)           # (L, CP, CP)
    rb = padc(params["res_b"].astype(f32)[..., None], 1)                 # (L, CP, 1)
    wmix = padc(params["mix_w"].reshape(L, C).astype(f32)[..., None], 1) # (L, CP, 1)
    bmix = params["mix_b"].reshape(1, 1).astype(f32)                     # (1, 1)

    # ---- pack the waveform: left halo pad + overlapping windows + batch-on-lanes
    x_flat = x_ncl[:, 0, :].astype(f32)                                  # (B, T)
    x_padded = jnp.concatenate(
        [jnp.zeros((B, halo), f32), x_flat, jnp.zeros((B, t_round - T), f32)],
        axis=1)                                                          # (B, halo+t_round)
    win_idx = (jnp.arange(n_tiles) * t_tile)[:, None] + jnp.arange(W)[None, :]
    x_win = x_padded[:, win_idx]                                         # (B, n_tiles, W)
    x_pack = (x_win.reshape(n_bblk, blk_b, n_tiles, W)
                   .transpose(0, 2, 1, 3)
                   .reshape(n_bblk, n_tiles, 1, blk_b * W))              # packed slabs

    kernel = functools.partial(
        wavenet_kernel,
        dilations=tuple(int(d) for d in dilations), kernel_size=K,
        cp=CP, blk_b=blk_b, halo=halo, t_tile=t_tile)

    def full(shape):
        n = len(shape)
        return pl.BlockSpec(shape, lambda bb, ti, _n=n: (0,) * _n)

    out_pack = pl.pallas_call(
        kernel,
        out_shape=jax.ShapeDtypeStruct((n_bblk, n_tiles, 1, blk_b * t_tile), f32),
        grid=(n_bblk, n_tiles),
        in_specs=[
            pl.BlockSpec((1, 1, 1, blk_b * W), lambda bb, ti: (bb, ti, 0, 0)),
            full((CP, 1)), full((CP, 1)),                     # input 1x1 conv
            full((L, CP, K * CP)), full((L, CP, 1)),          # tanh-half weights
            full((L, CP, K * CP)), full((L, CP, 1)),          # sigmoid-half weights
            full((L, CP, CP)), full((L, CP, 1)),              # residual convs
            full((L, CP, 1)), full((1, 1)),                   # folded linear_mix
        ],
        out_specs=pl.BlockSpec((1, 1, 1, blk_b * t_tile),
                               lambda bb, ti: (bb, ti, 0, 0)),
        compiler_params=pltpu.CompilerParams(
            # Tiles are independent (halo recomputed per tile) -> both parallel.
            dimension_semantics=("parallel", "parallel"),
            vmem_limit_bytes=48 * 1024 * 1024),   # headroom under v7x's 64 MiB
    )(x_pack, w_in, b_in, wt, bt, ws, bs, rw, rb, wmix, bmix)

    # ---- unpack back to (B, 1, T) -------------------------------------------
    out = (out_pack.reshape(n_bblk, n_tiles, blk_b, t_tile)
                   .transpose(0, 2, 1, 3)
                   .reshape(B, t_round)[:, :T][:, None, :])
    return out


# ---------------------------------------------------------------------------
# Pure-JAX reference (mirrors PyTorch CausalConv1d / WaveNet.forward exactly)
# ---------------------------------------------------------------------------

def _causal_conv1d_ref(x_bct, w_oik, bias, dilation):
    """x: (B, Cin, T); w: (Cout, Cin, K); bias: (Cout,). PyTorch semantics."""
    B, _, T = x_bct.shape
    K = w_oik.shape[2]
    y = jnp.zeros((B, w_oik.shape[0], T), jnp.float32) + bias[None, :, None]
    for k in range(K):
        s = (K - 1 - k) * dilation
        xs = x_bct if s == 0 else jnp.pad(x_bct, ((0, 0), (0, 0), (s, 0)))[:, :, :T]
        y = y + jnp.einsum("oc,bct->bot", w_oik[:, :, k], xs,
                           precision=jax.lax.Precision.HIGHEST)
    return y


def wavenet_ref(x_ncl, params, dilations, C):
    x = x_ncl.astype(jnp.float32)
    out = _causal_conv1d_ref(x, params["input_w"], params["input_b"], 1)
    skips = []
    for l, d in enumerate(dilations):
        x_in = out
        h = _causal_conv1d_ref(x_in, params["hidden_w"][l], params["hidden_b"][l], d)
        gated = jnp.tanh(h[:, :C]) * jax.nn.sigmoid(h[:, C:])
        skips.append(gated)
        out = _causal_conv1d_ref(gated, params["res_w"][l], params["res_b"][l], 1) + x_in
    cat = jnp.concatenate(skips, axis=1)
    return _causal_conv1d_ref(cat, params["mix_w"], params["mix_b"], 1)


# ---------------------------------------------------------------------------
# Main
# ---------------------------------------------------------------------------

if __name__ == "__main__":
    # WaveNet(num_channels=4, dilation_depth=2, num_repeat=2, kernel_size=3)
    # -> dilations [1, 2, 1, 2]
    num_channels = 4
    dilation_depth = 2
    num_repeat = 2
    kernel_size = 3
    dilations = [2 ** d for d in range(dilation_depth)] * num_repeat
    L = len(dilations)
    C = num_channels

    B, T = 2, 256    # 2 T-tiles of 128 -> exercises halo tiling; >= 2 grid steps

    key = jax.random.PRNGKey(0)
    keys = jax.random.split(key, 9)
    scale = 0.2
    params = {
        # PyTorch Conv1d weight layouts (Cout, Cin, K)
        "input_w": scale * jax.random.normal(keys[0], (C, 1, 1), jnp.float32),
        "input_b": scale * jax.random.normal(keys[1], (C,), jnp.float32),
        "hidden_w": scale * jax.random.normal(keys[2], (L, 2 * C, C, kernel_size), jnp.float32),
        "hidden_b": scale * jax.random.normal(keys[3], (L, 2 * C), jnp.float32),
        "res_w": scale * jax.random.normal(keys[4], (L, C, C, 1), jnp.float32),
        "res_b": scale * jax.random.normal(keys[5], (L, C), jnp.float32),
        "mix_w": scale * jax.random.normal(keys[6], (1, L * C, 1), jnp.float32),
        "mix_b": scale * jax.random.normal(keys[7], (1,), jnp.float32),
    }

    x = jax.random.normal(keys[8], (B, 1, T), jnp.float32)

    out = wavenet_forward(x, params, dilations, num_channels, kernel_size)
    out = jax.block_until_ready(out)
    assert out.shape == (B, 1, T), out.shape

    ref = wavenet_ref(x, params, dilations, C)
    err = jnp.max(jnp.abs(out - ref))
    assert jnp.allclose(out, ref, atol=1e-3, rtol=1e-3), f"mismatch: max abs err {err}"

    print("KERNEL_OK")
</pallas_src>

<mosaic_0001>
module attributes {stable_mosaic.version = 11 : i64} {
  func.func @wavenet_kernel(%arg0: i32, %arg1: i32, %arg2: memref<1x1x1x512xf32, #tpu.memory_space<vmem>>, %arg3: memref<8x1xf32, #tpu.memory_space<vmem>>, %arg4: memref<8x1xf32, #tpu.memory_space<vmem>>, %arg5: memref<4x8x24xf32, #tpu.memory_space<vmem>>, %arg6: memref<4x8x1xf32, #tpu.memory_space<vmem>>, %arg7: memref<4x8x24xf32, #tpu.memory_space<vmem>>, %arg8: memref<4x8x1xf32, #tpu.memory_space<vmem>>, %arg9: memref<4x8x8xf32, #tpu.memory_space<vmem>>, %arg10: memref<4x8x1xf32, #tpu.memory_space<vmem>>, %arg11: memref<4x8x1xf32, #tpu.memory_space<vmem>>, %arg12: memref<1x1xf32, #tpu.memory_space<vmem>>, %arg13: memref<1x1x1x256xf32, #tpu.memory_space<vmem>>) attributes {dimension_semantics = [#tpu.dimension_semantics<parallel>, #tpu.dimension_semantics<parallel>], iteration_bounds = array<i64: 1, 2>, scalar_prefetch = 0 : i64, scratch_operands = 0 : i64, tpu.core_type = #tpu.core_type<tc>, window_params = [{transform_indices = @transform_0, window_bounds = array<i64: 1, 1, 1, 512>}, {pipeline_mode = #tpu.pipeline_mode<synchronous>, transform_indices = @transform_1, window_bounds = array<i64: 8, 1>}, {pipeline_mode = #tpu.pipeline_mode<synchronous>, transform_indices = @transform_2, window_bounds = array<i64: 8, 1>}, {pipeline_mode = #tpu.pipeline_mode<synchronous>, transform_indices = @transform_3, window_bounds = array<i64: 4, 8, 24>}, {pipeline_mode = #tpu.pipeline_mode<synchronous>, transform_indices = @transform_4, window_bounds = array<i64: 4, 8, 1>}, {pipeline_mode = #tpu.pipeline_mode<synchronous>, transform_indices = @transform_5, window_bounds = array<i64: 4, 8, 24>}, {pipeline_mode = #tpu.pipeline_mode<synchronous>, transform_indices = @transform_6, window_bounds = array<i64: 4, 8, 1>}, {pipeline_mode = #tpu.pipeline_mode<synchronous>, transform_indices = @transform_7, window_bounds = array<i64: 4, 8, 8>}, {pipeline_mode = #tpu.pipeline_mode<synchronous>, transform_indices = @transform_8, window_bounds = array<i64: 4, 8, 1>}, {pipeline_mode = #tpu.pipeline_mode<synchronous>, transform_indices = @transform_9, window_bounds = array<i64: 4, 8, 1>}, {pipeline_mode = #tpu.pipeline_mode<synchronous>, transform_indices = @transform_10, window_bounds = array<i64: 1, 1>}, {transform_indices = @transform_11, window_bounds = array<i64: 1, 1, 1, 256>}]} {
    %c0 = arith.constant 0 : index
    %c0_0 = arith.constant 0 : index
    %c0_1 = arith.constant 0 : index
    %c0_2 = arith.constant 0 : index
    %0 = vector.load %arg2[%c0, %c0_0, %c0_1, %c0_2] : memref<1x1x1x512xf32, #tpu.memory_space<vmem>>, vector<1x1x1x512xf32>
    %1 = vector.shape_cast %0 : vector<1x1x1x512xf32> to vector<1x512xf32>
    %2 = tpu.iota {dimensions = array<i32: 1>} : vector<8x512xi32>
    %c256_i32 = arith.constant 256 : i32
    %c0_i32 = arith.constant 0 : i32
    %3 = arith.cmpi eq, %c256_i32, %c0_i32 : i32
    %c1_i32 = arith.constant 1 : i32
    %4 = arith.select %3, %c1_i32, %c256_i32 : i32
    %5 = vector.broadcast %4 : i32 to vector<8x512xi32>
    %6 = arith.remsi %2, %5 : vector<8x512xi32>
    %c0_i32_3 = arith.constant 0 : i32
    %7 = vector.broadcast %c0_i32_3 : i32 to vector<8x512xi32>
    %8 = arith.cmpi ne, %6, %7 : vector<8x512xi32>
    %c0_i32_4 = arith.constant 0 : i32
    %9 = vector.broadcast %c0_i32_4 : i32 to vector<8x512xi32>
    %10 = arith.cmpi slt, %6, %9 : vector<8x512xi32>
    %c0_i32_5 = arith.constant 0 : i32
    %11 = arith.cmpi slt, %4, %c0_i32_5 : i32
    %12 = vector.broadcast %11 : i1 to vector<8x512xi1>
    %13 = vector.broadcast %12 : vector<8x512xi1> to vector<8x512xi1>
    %14 = arith.xori %10, %13 : vector<8x512xi1>
    %15 = arith.andi %14, %8 : vector<8x512xi1>
    %16 = vector.broadcast %4 : i32 to vector<8x512xi32>
    %17 = arith.addi %6, %16 : vector<8x512xi32>
    %18 = arith.select %15, %17, %6 : vector<8x512xi1>, vector<8x512xi32>
    %c128_i32 = arith.constant 128 : i32
    %19 = arith.muli %arg1, %c128_i32 : i32
    %c128_i32_6 = arith.constant 128 : i32
    %20 = arith.subi %c128_i32_6, %19 : i32
    %21 = vector.broadcast %20 : i32 to vector<8x512xi32>
    %22 = arith.cmpi sge, %18, %21 : vector<8x512xi32>
    %c0_7 = arith.constant 0 : index
    %c0_8 = arith.constant 0 : index
    %23 = vector.load %arg3[%c0_7, %c0_8] : memref<8x1xf32, #tpu.memory_space<vmem>>, vector<8x1xf32>
    %24 = vector.broadcast %23 : vector<8x1xf32> to vector<8x512xf32>
    %25 = vector.broadcast %1 : vector<1x512xf32> to vector<8x512xf32>
    %26 = arith.mulf %24, %25 : vector<8x512xf32>
    %c0_9 = arith.constant 0 : index
    %c0_10 = arith.constant 0 : index
    %27 = vector.load %arg4[%c0_9, %c0_10] : memref<8x1xf32, #tpu.memory_space<vmem>>, vector<8x1xf32>
    %28 = vector.broadcast %27 : vector<8x1xf32> to vector<8x512xf32>
    %29 = arith.addf %26, %28 : vector<8x512xf32>
    %cst = arith.constant 0.000000e+00 : f32
    %30 = vector.broadcast %cst : f32 to vector<8x512xf32>
    %31 = arith.select %22, %29, %30 : vector<8x512xi1>, vector<8x512xf32>
    %cst_11 = arith.constant 0.000000e+00 : f32
    %32 = vector.broadcast %cst_11 : f32 to vector<8x512xf32>
    %c2_i32 = arith.constant 2 : i32
    %33 = tpu.dynamic_rotate %31 by %c2_i32 dim 1 : vector<8x512xf32>, i32 -> vector<8x512xf32>
    %c1_i32_12 = arith.constant 1 : i32
    %34 = tpu.dynamic_rotate %31 by %c1_i32_12 dim 1 : vector<8x512xf32>, i32 -> vector<8x512xf32>
    %35 = tpu.concatenate %33, %34, %31 in 0 : vector<8x512xf32>, vector<8x512xf32>, vector<8x512xf32> -> vector<24x512xf32>
    %c0_13 = arith.constant 0 : index
    %c0_14 = arith.constant 0 : index
    %c0_15 = arith.constant 0 : index
    %36 = vector.load %arg5[%c0_13, %c0_14, %c0_15] : memref<4x8x24xf32, #tpu.memory_space<vmem>>, vector<1x8x24xf32>
    %37 = vector.shape_cast %36 : vector<1x8x24xf32> to vector<8x24xf32>
    %cst_16 = arith.constant dense<0.000000e+00> : vector<8x512xf32>
    %38 = tpu.matmul %37, %35, %cst_16 {dimension_numbers = #tpu.dot_dimension_numbers<[1], [0], [0], [1], [0, 0, 1, 1], [], []>} : vector<8x24xf32>, vector<24x512xf32>, vector<8x512xf32> -> vector<8x512xf32>
    %c0_17 = arith.constant 0 : index
    %c0_18 = arith.constant 0 : index
    %c0_19 = arith.constant 0 : index
    %39 = vector.load %arg6[%c0_17, %c0_18, %c0_19] : memref<4x8x1xf32, #tpu.memory_space<vmem>>, vector<1x8x1xf32>
    %40 = vector.shape_cast %39 : vector<1x8x1xf32> to vector<8x1xf32>
    %41 = vector.broadcast %40 : vector<8x1xf32> to vector<8x512xf32>
    %42 = arith.addf %38, %41 : vector<8x512xf32>
    %c0_20 = arith.constant 0 : index
    %c0_21 = arith.constant 0 : index
    %c0_22 = arith.constant 0 : index
    %43 = vector.load %arg7[%c0_20, %c0_21, %c0_22] : memref<4x8x24xf32, #tpu.memory_space<vmem>>, vector<1x8x24xf32>
    %44 = vector.shape_cast %43 : vector<1x8x24xf32> to vector<8x24xf32>
    %cst_23 = arith.constant dense<0.000000e+00> : vector<8x512xf32>
    %45 = tpu.matmul %44, %35, %cst_23 {dimension_numbers = #tpu.dot_dimension_numbers<[1], [0], [0], [1], [0, 0, 1, 1], [], []>} : vector<8x24xf32>, vector<24x512xf32>, vector<8x512xf32> -> vector<8x512xf32>
    %c0_24 = arith.constant 0 : index
    %c0_25 = arith.constant 0 : index
    %c0_26 = arith.constant 0 : index
    %46 = vector.load %arg8[%c0_24, %c0_25, %c0_26] : memref<4x8x1xf32, #tpu.memory_space<vmem>>, vector<1x8x1xf32>
    %47 = vector.shape_cast %46 : vector<1x8x1xf32> to vector<8x1xf32>
    %48 = vector.broadcast %47 : vector<8x1xf32> to vector<8x512xf32>
    %49 = arith.addf %45, %48 : vector<8x512xf32>
    %50 = math.tanh %42 : vector<8x512xf32>
    %cst_27 = arith.constant 5.000000e-01 : f32
    %51 = vector.broadcast %cst_27 : f32 to vector<8x512xf32>
    %52 = arith.mulf %51, %49 : vector<8x512xf32>
    %53 = math.tanh %52 : vector<8x512xf32>
    %cst_28 = arith.constant 5.000000e-01 : f32
    %54 = vector.broadcast %cst_28 : f32 to vector<8x512xf32>
    %55 = arith.mulf %54, %53 : vector<8x512xf32>
    %cst_29 = arith.constant 5.000000e-01 : f32
    %56 = vector.broadcast %cst_29 : f32 to vector<8x512xf32>
    %57 = arith.addf %55, %56 : vector<8x512xf32>
    %58 = arith.mulf %50, %57 : vector<8x512xf32>
    %c0_30 = arith.constant 0 : index
    %c0_31 = arith.constant 0 : index
    %c0_32 = arith.constant 0 : index
    %59 = vector.load %arg11[%c0_30, %c0_31, %c0_32] : memref<4x8x1xf32, #tpu.memory_space<vmem>>, vector<1x8x1xf32>
    %60 = vector.shape_cast %59 : vector<1x8x1xf32> to vector<8x1xf32>
    %61 = vector.broadcast %60 : vector<8x1xf32> to vector<8x512xf32>
    %62 = arith.mulf %61, %58 : vector<8x512xf32>
    %63 = arith.addf %32, %62 : vector<8x512xf32>
    %c0_33 = arith.constant 0 : index
    %c0_34 = arith.constant 0 : index
    %c0_35 = arith.constant 0 : index
    %64 = vector.load %arg9[%c0_33, %c0_34, %c0_35] : memref<4x8x8xf32, #tpu.memory_space<vmem>>, vector<1x8x8xf32>
    %65 = vector.shape_cast %64 : vector<1x8x8xf32> to vector<8x8xf32>
    %cst_36 = arith.constant dense<0.000000e+00> : vector<8x512xf32>
    %66 = tpu.matmul %65, %58, %cst_36 {dimension_numbers = #tpu.dot_dimension_numbers<[1], [0], [0], [1], [0, 0, 1, 1], [], []>} : vector<8x8xf32>, vector<8x512xf32>, vector<8x512xf32> -> vector<8x512xf32>
    %c0_37 = arith.constant 0 : index
    %c0_38 = arith.constant 0 : index
    %c0_39 = arith.constant 0 : index
    %67 = vector.load %arg10[%c0_37, %c0_38, %c0_39] : memref<4x8x1xf32, #tpu.memory_space<vmem>>, vector<1x8x1xf32>
    %68 = vector.shape_cast %67 : vector<1x8x1xf32> to vector<8x1xf32>
    %69 = vector.broadcast %68 : vector<8x1xf32> to vector<8x512xf32>
    %70 = arith.addf %66, %69 : vector<8x512xf32>
    %71 = arith.addf %70, %31 : vector<8x512xf32>
    %cst_40 = arith.constant 0.000000e+00 : f32
    %72 = vector.broadcast %cst_40 : f32 to vector<8x512xf32>
    %73 = arith.select %22, %71, %72 : vector<8x512xi1>, vector<8x512xf32>
    %c4_i32 = arith.constant 4 : i32
    %74 = tpu.dynamic_rotate %73 by %c4_i32 dim 1 : vector<8x512xf32>, i32 -> vector<8x512xf32>
    %c2_i32_41 = arith.constant 2 : i32
    %75 = tpu.dynamic_rotate %73 by %c2_i32_41 dim 1 : vector<8x512xf32>, i32 -> vector<8x512xf32>
    %76 = tpu.concatenate %74, %75, %73 in 0 : vector<8x512xf32>, vector<8x512xf32>, vector<8x512xf32> -> vector<24x512xf32>
    %c1 = arith.constant 1 : index
    %c0_42 = arith.constant 0 : index
    %c0_43 = arith.constant 0 : index
    %77 = vector.load %arg5[%c1, %c0_42, %c0_43] : memref<4x8x24xf32, #tpu.memory_space<vmem>>, vector<1x8x24xf32>
    %78 = vector.shape_cast %77 : vector<1x8x24xf32> to vector<8x24xf32>
    %cst_44 = arith.constant dense<0.000000e+00> : vector<8x512xf32>
    %79 = tpu.matmul %78, %76, %cst_44 {dimension_numbers = #tpu.dot_dimension_numbers<[1], [0], [0], [1], [0, 0, 1, 1], [], []>} : vector<8x24xf32>, vector<24x512xf32>, vector<8x512xf32> -> vector<8x512xf32>
    %c1_45 = arith.constant 1 : index
    %c0_46 = arith.constant 0 : index
    %c0_47 = arith.constant 0 : index
    %80 = vector.load %arg6[%c1_45, %c0_46, %c0_47] : memref<4x8x1xf32, #tpu.memory_space<vmem>>, vector<1x8x1xf32>
    %81 = vector.shape_cast %80 : vector<1x8x1xf32> to vector<8x1xf32>
    %82 = vector.broadcast %81 : vector<8x1xf32> to vector<8x512xf32>
    %83 = arith.addf %79, %82 : vector<8x512xf32>
    %c1_48 = arith.constant 1 : index
    %c0_49 = arith.constant 0 : index
    %c0_50 = arith.constant 0 : index
    %84 = vector.load %arg7[%c1_48, %c0_49, %c0_50] : memref<4x8x24xf32, #tpu.memory_space<vmem>>, vector<1x8x24xf32>
    %85 = vector.shape_cast %84 : vector<1x8x24xf32> to vector<8x24xf32>
    %cst_51 = arith.constant dense<0.000000e+00> : vector<8x512xf32>
    %86 = tpu.matmul %85, %76, %cst_51 {dimension_numbers = #tpu.dot_dimension_numbers<[1], [0], [0], [1], [0, 0, 1, 1], [], []>} : vector<8x24xf32>, vector<24x512xf32>, vector<8x512xf32> -> vector<8x512xf32>
    %c1_52 = arith.constant 1 : index
    %c0_53 = arith.constant 0 : index
    %c0_54 = arith.constant 0 : index
    %87 = vector.load %arg8[%c1_52, %c0_53, %c0_54] : memref<4x8x1xf32, #tpu.memory_space<vmem>>, vector<1x8x1xf32>
    %88 = vector.shape_cast %87 : vector<1x8x1xf32> to vector<8x1xf32>
    %89 = vector.broadcast %88 : vector<8x1xf32> to vector<8x512xf32>
    %90 = arith.addf %86, %89 : vector<8x512xf32>
    %91 = math.tanh %83 : vector<8x512xf32>
    %cst_55 = arith.constant 5.000000e-01 : f32
    %92 = vector.broadcast %cst_55 : f32 to vector<8x512xf32>
    %93 = arith.mulf %92, %90 : vector<8x512xf32>
    %94 = math.tanh %93 : vector<8x512xf32>
    %cst_56 = arith.constant 5.000000e-01 : f32
    %95 = vector.broadcast %cst_56 : f32 to vector<8x512xf32>
    %96 = arith.mulf %95, %94 : vector<8x512xf32>
    %cst_57 = arith.constant 5.000000e-01 : f32
    %97 = vector.broadcast %cst_57 : f32 to vector<8x512xf32>
    %98 = arith.addf %96, %97 : vector<8x512xf32>
    %99 = arith.mulf %91, %98 : vector<8x512xf32>
    %c1_58 = arith.constant 1 : index
    %c0_59 = arith.constant 0 : index
    %c0_60 = arith.constant 0 : index
    %100 = vector.load %arg11[%c1_58, %c0_59, %c0_60] : memref<4x8x1xf32, #tpu.memory_space<vmem>>, vector<1x8x1xf32>
    %101 = vector.shape_cast %100 : vector<1x8x1xf32> to vector<8x1xf32>
    %102 = vector.broadcast %101 : vector<8x1xf32> to vector<8x512xf32>
    %103 = arith.mulf %102, %99 : vector<8x512xf32>
    %104 = arith.addf %63, %103 : vector<8x512xf32>
    %c1_61 = arith.constant 1 : index
    %c0_62 = arith.constant 0 : index
    %c0_63 = arith.constant 0 : index
    %105 = vector.load %arg9[%c1_61, %c0_62, %c0_63] : memref<4x8x8xf32, #tpu.memory_space<vmem>>, vector<1x8x8xf32>
    %106 = vector.shape_cast %105 : vector<1x8x8xf32> to vector<8x8xf32>
    %cst_64 = arith.constant dense<0.000000e+00> : vector<8x512xf32>
    %107 = tpu.matmul %106, %99, %cst_64 {dimension_numbers = #tpu.dot_dimension_numbers<[1], [0], [0], [1], [0, 0, 1, 1], [], []>} : vector<8x8xf32>, vector<8x512xf32>, vector<8x512xf32> -> vector<8x512xf32>
    %c1_65 = arith.constant 1 : index
    %c0_66 = arith.constant 0 : index
    %c0_67 = arith.constant 0 : index
    %108 = vector.load %arg10[%c1_65, %c0_66, %c0_67] : memref<4x8x1xf32, #tpu.memory_space<vmem>>, vector<1x8x1xf32>
    %109 = vector.shape_cast %108 : vector<1x8x1xf32> to vector<8x1xf32>
    %110 = vector.broadcast %109 : vector<8x1xf32> to vector<8x512xf32>
    %111 = arith.addf %107, %110 : vector<8x512xf32>
    %112 = arith.addf %111, %73 : vector<8x512xf32>
    %cst_68 = arith.constant 0.000000e+00 : f32
    %113 = vector.broadcast %cst_68 : f32 to vector<8x512xf32>
    %114 = arith.select %22, %112, %113 : vector<8x512xi1>, vector<8x512xf32>
    %c2_i32_69 = arith.constant 2 : i32
    %115 = tpu.dynamic_rotate %114 by %c2_i32_69 dim 1 : vector<8x512xf32>, i32 -> vector<8x512xf32>
    %c1_i32_70 = arith.constant 1 : i32
    %116 = tpu.dynamic_rotate %114 by %c1_i32_70 dim 1 : vector<8x512xf32>, i32 -> vector<8x512xf32>
    %117 = tpu.concatenate %115, %116, %114 in 0 : vector<8x512xf32>, vector<8x512xf32>, vector<8x512xf32> -> vector<24x512xf32>
    %c2 = arith.constant 2 : index
    %c0_71 = arith.constant 0 : index
    %c0_72 = arith.constant 0 : index
    %118 = vector.load %arg5[%c2, %c0_71, %c0_72] : memref<4x8x24xf32, #tpu.memory_space<vmem>>, vector<1x8x24xf32>
    %119 = vector.shape_cast %118 : vector<1x8x24xf32> to vector<8x24xf32>
    %cst_73 = arith.constant dense<0.000000e+00> : vector<8x512xf32>
    %120 = tpu.matmul %119, %117, %cst_73 {dimension_numbers = #tpu.dot_dimension_numbers<[1], [0], [0], [1], [0, 0, 1, 1], [], []>} : vector<8x24xf32>, vector<24x512xf32>, vector<8x512xf32> -> vector<8x512xf32>
    %c2_74 = arith.constant 2 : index
    %c0_75 = arith.constant 0 : index
    %c0_76 = arith.constant 0 : index
    %121 = vector.load %arg6[%c2_74, %c0_75, %c0_76] : memref<4x8x1xf32, #tpu.memory_space<vmem>>, vector<1x8x1xf32>
    %122 = vector.shape_cast %121 : vector<1x8x1xf32> to vector<8x1xf32>
    %123 = vector.broadcast %122 : vector<8x1xf32> to vector<8x512xf32>
    %124 = arith.addf %120, %123 : vector<8x512xf32>
    %c2_77 = arith.constant 2 : index
    %c0_78 = arith.constant 0 : index
    %c0_79 = arith.constant 0 : index
    %125 = vector.load %arg7[%c2_77, %c0_78, %c0_79] : memref<4x8x24xf32, #tpu.memory_space<vmem>>, vector<1x8x24xf32>
    %126 = vector.shape_cast %125 : vector<1x8x24xf32> to vector<8x24xf32>
    %cst_80 = arith.constant dense<0.000000e+00> : vector<8x512xf32>
    %127 = tpu.matmul %126, %117, %cst_80 {dimension_numbers = #tpu.dot_dimension_numbers<[1], [0], [0], [1], [0, 0, 1, 1], [], []>} : vector<8x24xf32>, vector<24x512xf32>, vector<8x512xf32> -> vector<8x512xf32>
    %c2_81 = arith.constant 2 : index
    %c0_82 = arith.constant 0 : index
    %c0_83 = arith.constant 0 : index
    %128 = vector.load %arg8[%c2_81, %c0_82, %c0_83] : memref<4x8x1xf32, #tpu.memory_space<vmem>>, vector<1x8x1xf32>
    %129 = vector.shape_cast %128 : vector<1x8x1xf32> to vector<8x1xf32>
    %130 = vector.broadcast %129 : vector<8x1xf32> to vector<8x512xf32>
    %131 = arith.addf %127, %130 : vector<8x512xf32>
    %132 = math.tanh %124 : vector<8x512xf32>
    %cst_84 = arith.constant 5.000000e-01 : f32
    %133 = vector.broadcast %cst_84 : f32 to vector<8x512xf32>
    %134 = arith.mulf %133, %131 : vector<8x512xf32>
    %135 = math.tanh %134 : vector<8x512xf32>
    %cst_85 = arith.constant 5.000000e-01 : f32
    %136 = vector.broadcast %cst_85 : f32 to vector<8x512xf32>
    %137 = arith.mulf %136, %135 : vector<8x512xf32>
    %cst_86 = arith.constant 5.000000e-01 : f32
    %138 = vector.broadcast %cst_86 : f32 to vector<8x512xf32>
    %139 = arith.addf %137, %138 : vector<8x512xf32>
    %140 = arith.mulf %132, %139 : vector<8x512xf32>
    %c2_87 = arith.constant 2 : index
    %c0_88 = arith.constant 0 : index
    %c0_89 = arith.constant 0 : index
    %141 = vector.load %arg11[%c2_87, %c0_88, %c0_89] : memref<4x8x1xf32, #tpu.memory_space<vmem>>, vector<1x8x1xf32>
    %142 = vector.shape_cast %141 : vector<1x8x1xf32> to vector<8x1xf32>
    %143 = vector.broadcast %142 : vector<8x1xf32> to vector<8x512xf32>
    %144 = arith.mulf %143, %140 : vector<8x512xf32>
    %145 = arith.addf %104, %144 : vector<8x512xf32>
    %c2_90 = arith.constant 2 : index
    %c0_91 = arith.constant 0 : index
    %c0_92 = arith.constant 0 : index
    %146 = vector.load %arg9[%c2_90, %c0_91, %c0_92] : memref<4x8x8xf32, #tpu.memory_space<vmem>>, vector<1x8x8xf32>
    %147 = vector.shape_cast %146 : vector<1x8x8xf32> to vector<8x8xf32>
    %cst_93 = arith.constant dense<0.000000e+00> : vector<8x512xf32>
    %148 = tpu.matmul %147, %140, %cst_93 {dimension_numbers = #tpu.dot_dimension_numbers<[1], [0], [0], [1], [0, 0, 1, 1], [], []>} : vector<8x8xf32>, vector<8x512xf32>, vector<8x512xf32> -> vector<8x512xf32>
    %c2_94 = arith.constant 2 : index
    %c0_95 = arith.constant 0 : index
    %c0_96 = arith.constant 0 : index
    %149 = vector.load %arg10[%c2_94, %c0_95, %c0_96] : memref<4x8x1xf32, #tpu.memory_space<vmem>>, vector<1x8x1xf32>
    %150 = vector.shape_cast %149 : vector<1x8x1xf32> to vector<8x1xf32>
    %151 = vector.broadcast %150 : vector<8x1xf32> to vector<8x512xf32>
    %152 = arith.addf %148, %151 : vector<8x512xf32>
    %153 = arith.addf %152, %114 : vector<8x512xf32>
    %cst_97 = arith.constant 0.000000e+00 : f32
    %154 = vector.broadcast %cst_97 : f32 to vector<8x512xf32>
    %155 = arith.select %22, %153, %154 : vector<8x512xi1>, vector<8x512xf32>
    %c4_i32_98 = arith.constant 4 : i32
    %156 = tpu.dynamic_rotate %155 by %c4_i32_98 dim 1 : vector<8x512xf32>, i32 -> vector<8x512xf32>
    %c2_i32_99 = arith.constant 2 : i32
    %157 = tpu.dynamic_rotate %155 by %c2_i32_99 dim 1 : vector<8x512xf32>, i32 -> vector<8x512xf32>
    %158 = tpu.concatenate %156, %157, %155 in 0 : vector<8x512xf32>, vector<8x512xf32>, vector<8x512xf32> -> vector<24x512xf32>
    %c3 = arith.constant 3 : index
    %c0_100 = arith.constant 0 : index
    %c0_101 = arith.constant 0 : index
    %159 = vector.load %arg5[%c3, %c0_100, %c0_101] : memref<4x8x24xf32, #tpu.memory_space<vmem>>, vector<1x8x24xf32>
    %160 = vector.shape_cast %159 : vector<1x8x24xf32> to vector<8x24xf32>
    %cst_102 = arith.constant dense<0.000000e+00> : vector<8x512xf32>
    %161 = tpu.matmul %160, %158, %cst_102 {dimension_numbers = #tpu.dot_dimension_numbers<[1], [0], [0], [1], [0, 0, 1, 1], [], []>} : vector<8x24xf32>, vector<24x512xf32>, vector<8x512xf32> -> vector<8x512xf32>
    %c3_103 = arith.constant 3 : index
    %c0_104 = arith.constant 0 : index
    %c0_105 = arith.constant 0 : index
    %162 = vector.load %arg6[%c3_103, %c0_104, %c0_105] : memref<4x8x1xf32, #tpu.memory_space<vmem>>, vector<1x8x1xf32>
    %163 = vector.shape_cast %162 : vector<1x8x1xf32> to vector<8x1xf32>
    %164 = vector.broadcast %163 : vector<8x1xf32> to vector<8x512xf32>
    %165 = arith.addf %161, %164 : vector<8x512xf32>
    %c3_106 = arith.constant 3 : index
    %c0_107 = arith.constant 0 : index
    %c0_108 = arith.constant 0 : index
    %166 = vector.load %arg7[%c3_106, %c0_107, %c0_108] : memref<4x8x24xf32, #tpu.memory_space<vmem>>, vector<1x8x24xf32>
    %167 = vector.shape_cast %166 : vector<1x8x24xf32> to vector<8x24xf32>
    %cst_109 = arith.constant dense<0.000000e+00> : vector<8x512xf32>
    %168 = tpu.matmul %167, %158, %cst_109 {dimension_numbers = #tpu.dot_dimension_numbers<[1], [0], [0], [1], [0, 0, 1, 1], [], []>} : vector<8x24xf32>, vector<24x512xf32>, vector<8x512xf32> -> vector<8x512xf32>
    %c3_110 = arith.constant 3 : index
    %c0_111 = arith.constant 0 : index
    %c0_112 = arith.constant 0 : index
    %169 = vector.load %arg8[%c3_110, %c0_111, %c0_112] : memref<4x8x1xf32, #tpu.memory_space<vmem>>, vector<1x8x1xf32>
    %170 = vector.shape_cast %169 : vector<1x8x1xf32> to vector<8x1xf32>
    %171 = vector.broadcast %170 : vector<8x1xf32> to vector<8x512xf32>
    %172 = arith.addf %168, %171 : vector<8x512xf32>
    %173 = math.tanh %165 : vector<8x512xf32>
    %cst_113 = arith.constant 5.000000e-01 : f32
    %174 = vector.broadcast %cst_113 : f32 to vector<8x512xf32>
    %175 = arith.mulf %174, %172 : vector<8x512xf32>
    %176 = math.tanh %175 : vector<8x512xf32>
    %cst_114 = arith.constant 5.000000e-01 : f32
    %177 = vector.broadcast %cst_114 : f32 to vector<8x512xf32>
    %178 = arith.mulf %177, %176 : vector<8x512xf32>
    %cst_115 = arith.constant 5.000000e-01 : f32
    %179 = vector.broadcast %cst_115 : f32 to vector<8x512xf32>
    %180 = arith.addf %178, %179 : vector<8x512xf32>
    %181 = arith.mulf %173, %180 : vector<8x512xf32>
    %c3_116 = arith.constant 3 : index
    %c0_117 = arith.constant 0 : index
    %c0_118 = arith.constant 0 : index
    %182 = vector.load %arg11[%c3_116, %c0_117, %c0_118] : memref<4x8x1xf32, #tpu.memory_space<vmem>>, vector<1x8x1xf32>
    %183 = vector.shape_cast %182 : vector<1x8x1xf32> to vector<8x1xf32>
    %184 = vector.broadcast %183 : vector<8x1xf32> to vector<8x512xf32>
    %185 = arith.mulf %184, %181 : vector<8x512xf32>
    %186 = arith.addf %145, %185 : vector<8x512xf32>
    %cst_119 = arith.constant dense<0.000000e+00> : vector<512xf32>
    %187 = vector.multi_reduction <add>, %186, %cst_119 [0] : vector<8x512xf32> to vector<512xf32>
    %188 = vector.shape_cast %187 : vector<512xf32> to vector<1x512xf32>
    %c0_120 = arith.constant 0 : index
    %c0_121 = arith.constant 0 : index
    %189 = vector.load %arg12[%c0_120, %c0_121] : memref<1x1xf32, #tpu.memory_space<vmem>>, vector<1x1xf32>
    %190 = vector.broadcast %189 : vector<1x1xf32> to vector<1x512xf32>
    %191 = arith.addf %188, %190 : vector<1x512xf32>
    %192 = vector.extract_strided_slice %191 {offsets = [0, 128], sizes = [1, 128], strides = [1, 1]} : vector<1x512xf32> to vector<1x128xf32>
    %193 = vector.extract_strided_slice %191 {offsets = [0, 384], sizes = [1, 128], strides = [1, 1]} : vector<1x512xf32> to vector<1x128xf32>
    %194 = tpu.concatenate %192, %193 in 1 : vector<1x128xf32>, vector<1x128xf32> -> vector<1x256xf32>
    %c0_122 = arith.constant 0 : index
    %c0_123 = arith.constant 0 : index
    %c0_124 = arith.constant 0 : index
    %c0_125 = arith.constant 0 : index
    %195 = vector.load %arg13[%c0_122, %c0_123, %c0_124, %c0_125] : memref<1x1x1x256xf32, #tpu.memory_space<vmem>>, vector<1x1x1x256xf32>
    %196 = vector.shape_cast %195 : vector<1x1x1x256xf32> to vector<1x256xf32>
    %197 = vector.shape_cast %194 : vector<1x256xf32> to vector<1x1x1x256xf32>
    tpu.vector_store %arg13[%c0_122, %c0_123, %c0_124, %c0_125], %197 {strides = array<i32>} : memref<1x1x1x256xf32, #tpu.memory_space<vmem>>, vector<1x1x1x256xf32>,
    return
  }
  func.func @transform_0(%arg0: i32, %arg1: i32) -> (i32, i32, i32, i32) {
    %c0_i32 = arith.constant 0 : i32
    %c0_i32_0 = arith.constant 0 : i32
    %c0_i32_1 = arith.constant 0 : i32
    return %arg0, %arg1, %c0_i32, %c0_i32_0 : i32, i32, i32, i32
  }
  func.func @transform_1(%arg0: i32, %arg1: i32) -> (i32, i32) {
    %c0_i32 = arith.constant 0 : i32
    %c0_i32_0 = arith.constant 0 : i32
    %c0_i32_1 = arith.constant 0 : i32
    return %c0_i32, %c0_i32_0 : i32, i32
  }
  func.func @transform_2(%arg0: i32, %arg1: i32) -> (i32, i32) {
    %c0_i32 = arith.constant 0 : i32
    %c0_i32_0 = arith.constant 0 : i32
    %c0_i32_1 = arith.constant 0 : i32
    return %c0_i32, %c0_i32_0 : i32, i32
  }
  func.func @transform_3(%arg0: i32, %arg1: i32) -> (i32, i32, i32) {
    %c0_i32 = arith.constant 0 : i32
    %c0_i32_0 = arith.constant 0 : i32
    %c0_i32_1 = arith.constant 0 : i32
    %c0_i32_2 = arith.constant 0 : i32
    return %c0_i32, %c0_i32_0, %c0_i32_1 : i32, i32, i32
  }
  func.func @transform_4(%arg0: i32, %arg1: i32) -> (i32, i32, i32) {
    %c0_i32 = arith.constant 0 : i32
    %c0_i32_0 = arith.constant 0 : i32
    %c0_i32_1 = arith.constant 0 : i32
    %c0_i32_2 = arith.constant 0 : i32
    return %c0_i32, %c0_i32_0, %c0_i32_1 : i32, i32, i32
  }
  func.func @transform_5(%arg0: i32, %arg1: i32) -> (i32, i32, i32) {
    %c0_i32 = arith.constant 0 : i32
    %c0_i32_0 = arith.constant 0 : i32
    %c0_i32_1 = arith.constant 0 : i32
    %c0_i32_2 = arith.constant 0 : i32
    return %c0_i32, %c0_i32_0, %c0_i32_1 : i32, i32, i32
  }
  func.func @transform_6(%arg0: i32, %arg1: i32) -> (i32, i32, i32) {
    %c0_i32 = arith.constant 0 : i32
    %c0_i32_0 = arith.constant 0 : i32
    %c0_i32_1 = arith.constant 0 : i32
    %c0_i32_2 = arith.constant 0 : i32
    return %c0_i32, %c0_i32_0, %c0_i32_1 : i32, i32, i32
  }
  func.func @transform_7(%arg0: i32, %arg1: i32) -> (i32, i32, i32) {
    %c0_i32 = arith.constant 0 : i32
    %c0_i32_0 = arith.constant 0 : i32
    %c0_i32_1 = arith.constant 0 : i32
    %c0_i32_2 = arith.constant 0 : i32
    return %c0_i32, %c0_i32_0, %c0_i32_1 : i32, i32, i32
  }
  func.func @transform_8(%arg0: i32, %arg1: i32) -> (i32, i32, i32) {
    %c0_i32 = arith.constant 0 : i32
    %c0_i32_0 = arith.constant 0 : i32
    %c0_i32_1 = arith.constant 0 : i32
    %c0_i32_2 = arith.constant 0 : i32
    return %c0_i32, %c0_i32_0, %c0_i32_1 : i32, i32, i32
  }
  func.func @transform_9(%arg0: i32, %arg1: i32) -> (i32, i32, i32) {
    %c0_i32 = arith.constant 0 : i32
    %c0_i32_0 = arith.constant 0 : i32
    %c0_i32_1 = arith.constant 0 : i32
    %c0_i32_2 = arith.constant 0 : i32
    return %c0_i32, %c0_i32_0, %c0_i32_1 : i32, i32, i32
  }
  func.func @transform_10(%arg0: i32, %arg1: i32) -> (i32, i32) {
    %c0_i32 = arith.constant 0 : i32
    %c0_i32_0 = arith.constant 0 : i32
    %c0_i32_1 = arith.constant 0 : i32
    return %c0_i32, %c0_i32_0 : i32, i32
  }
  func.func @transform_11(%arg0: i32, %arg1: i32) -> (i32, i32, i32, i32) {
    %c0_i32 = arith.constant 0 : i32
    %c0_i32_0 = arith.constant 0 : i32
    %c0_i32_1 = arith.constant 0 : i32
    return %arg0, %arg1, %c0_i32, %c0_i32_0 : i32, i32, i32, i32
  }
}

</mosaic_0001>

<llo_original>
// kernel: tpu_custom_call.1
$region0: #{tpu_custom_call.1}
  #allocation0 [shape = 'u32[]', space=smem, size = 0x4, offset = 0x4, fixed_abs, tag = 'smem constant byte address 0x4 - core index']
  #allocation1 [shape = 'u32[144,128]{1,0:T(1,128)}', space=vmem, size = 0x12000, scoped, tag = 'internal scratch']
  #allocation2 [shape = 'f32[1,1]{1,0:T(1,128)S(1)}', space=vmem, size = 0x200, scoped, tag = 'scoped memory for tpu_custom_call.1']
  %s0 = inlined_call_operand.vmem [shape: f32[1,2,1,512], index: 0, kind: input, shape index: {}]
  %s1 = inlined_call_operand.vmem [shape: f32[8,1], index: 1, kind: input, shape index: {}]
  %s2 = inlined_call_operand.vmem [shape: f32[8,1], index: 2, kind: input, shape index: {}]
  %s3 = inlined_call_operand.vmem [shape: f32[4,8,24], index: 3, kind: input, shape index: {}]
  %s4 = inlined_call_operand.vmem [shape: f32[4,8,1], index: 4, kind: input, shape index: {}]
  %s5 = inlined_call_operand.vmem [shape: f32[4,8,24], index: 5, kind: input, shape index: {}]
  %s6 = inlined_call_operand.vmem [shape: f32[4,8,1], index: 6, kind: input, shape index: {}]
  %s7 = inlined_call_operand.vmem [shape: f32[4,8,8], index: 7, kind: input, shape index: {}]
  %s8 = inlined_call_operand.vmem [shape: f32[4,8,1], index: 8, kind: input, shape index: {}]
  %s9 = inlined_call_operand.vmem [shape: f32[4,8,1], index: 9, kind: input, shape index: {}]
  %s10 = inlined_call_operand.<no memory space> [shape: f32[1,1], index: 10, kind: input, shape index: {}]
  %s11 = inlined_call_operand.hbm [shape: f32[1,2,1,256], index: 11, kind: output, shape index: {}]
  %s12 = sld [smem:[#allocation0]]
  $region77: #{tpu_custom_call.1} parent=0
    _
  %s14 = ssub.s32 1, %s12
  %s15 = scalar_select 0, %s14, %s12
  %v16 = vstv %s10
  %17 = vst [vmem:[#allocation2] sm:$0x1] %v16
  $region1: #{tpu_custom_call.1} parent=0
    #allocation3 [shape = 'u8[2048]{0}', space=vmem, size = 0x800, scoped, tag = 'output window, operand 0']
    #allocation4 [shape = 's32[2]{0}', space=sflag, size = 0x8, scoped, tag = 'scoped memory for tpu_custom_call.1']
    %18 = vsyncpa [#allocation4], 0
    %s19 = scalar_lea.sflag [#allocation4], 1
    %20 = vsyncpa %s19, 0
    loop: start=0, step=1, limit=4
    $region2: #{tpu_custom_call.1} parent=1 // loop_pre_header
      _
    $region3: #{tpu_custom_call.1} parent=1 // loop_header
      %s22 = sphi 0, %s26
      %p23 = scmp.ge.s32.totalorder %s22, 4
      %s29 = sphi 0, %s41
      %s30 = sphi 0, %s37
      %s31 = sphi 0, %s29
      %s32 = sphi 0, %s30
      %s33 = sphi 0, %s31
      %s34 = sphi 0, %s32
      %s46 = sphi 0, %s48
      %s49 = sphi 0, %s46
      %s50 = sphi 0, %s49
      %s66 = sphi 0, %s50
      %s70 = sphi 0, %s70
      %s72 = sphi 0, %s70
      %s73 = sphi 0, %s72
      %s87 = sphi 0, %s73
      %s91 = sphi 0, %s91
      %s93 = sphi 0, %s91
      %s94 = sphi 0, %s93
      %s108 = sphi 0, %s94
      %s112 = sphi 0, %s112
      %s114 = sphi 0, %s112
      %s115 = sphi 0, %s114
      %s129 = sphi 0, %s115
      %s133 = sphi 0, %s133
      %s135 = sphi 0, %s133
      %s136 = sphi 0, %s135
      %s150 = sphi 0, %s136
      %s154 = sphi 0, %s154
      %s156 = sphi 0, %s154
      %s157 = sphi 0, %s156
      %s171 = sphi 0, %s157
      %s175 = sphi 0, %s175
      %s177 = sphi 0, %s175
      %s178 = sphi 0, %s177
      %s192 = sphi 0, %s178
      %s196 = sphi 0, %s196
      %s198 = sphi 0, %s196
      %s199 = sphi 0, %s198
      %s213 = sphi 0, %s199
      %s217 = sphi 0, %s217
      %s219 = sphi 0, %s217
      %s220 = sphi 0, %s219
      %s234 = sphi 0, %s220
      %s238 = sphi 0, %s238
      %s240 = sphi 0, %s238
      %s241 = sphi 0, %s240
      %s255 = sphi 0, %s241
      %s259 = sphi 0, %s259
      %s261 = sphi 0, %s259
      %s262 = sphi 0, %s261
      %s276 = sphi 0, %s262
      %s284 = sphi 0, %s286
      %s287 = sphi 0, %s284
      %s288 = sphi 0, %s287
      %s304 = sphi 0, %s288
    $region4: #{tpu_custom_call.1} parent=1 // loop_header_branch
      %25 = sbr.rel (%p23) target = $region8
    $region5: #{tpu_custom_call.1} parent=1 // loop_body
      %s27 = ssub.s32 %s22, 1
      %s28 = ssub.s32 %s22, 2
      %s35 = sadd.s32 1, %s30
      %p36 = scmp.ge.s32.totalorder %s35, 2
      %s37 = scalar_select %p36, 0, %s35
      %s38 = sadd.s32 1, %s29
      %s39 = scalar_select %p36, %s38, %s29
      %p40 = scmp.ge.s32.totalorder %s39, 1
      %s41 = scalar_select %p40, 0, %s39
      %s42 = ssub.s32 %s29, %s41
      %s43 = ssub.s32 %s30, %s37
      %s44 = sor.u32 %s42, %s43
      %p45 = scmp.eq.s32.totalorder %s44, 0
      %s47 = sadd.s32 %s46, 1
      %s48 = scalar_select %p45, %s46, %s47
      %p51 = pneg %p45
      %p52 = scmp.eq.s32.totalorder %s22, 1
      %p53 = por %p51, %p52
      %p54 = scmp.ne.s32.totalorder %s46, %s49
      %p55 = scmp.eq.s32.totalorder %s22, 0
      %p56 = por %p54, %p55
      %p57 = scmp.ne.s32.totalorder %s46, %s49
      %p58 = scmp.eq.s32.totalorder %s27, 1
      %p59 = por %p57, %p58
      %p60 = scmp.ne.s32.totalorder %s49, %s50
      %p61 = scmp.eq.s32.totalorder %s27, 0
      %p62 = por %p60, %p61
      %p63 = scmp.ne.s32.totalorder %s49, %s50
      %p64 = scmp.eq.s32.totalorder %s28, 1
      %p65 = por %p63, %p64
      %p67 = scmp.ne.s32.totalorder %s50, %s66
      %p68 = scmp.eq.s32.totalorder %s28, 0
      %p69 = por %p67, %p68
      %s71 = sadd.s32 %s70, 1
      %p74 = scmp.eq.s32.totalorder %s22, 1
      %p75 = scmp.ne.s32.totalorder %s70, %s72
      %p76 = scmp.eq.s32.totalorder %s22, 0
      %p77 = por %p75, %p76
      %p78 = scmp.ne.s32.totalorder %s70, %s72
      %p79 = scmp.eq.s32.totalorder %s27, 1
      %p80 = por %p78, %p79
      %p81 = scmp.ne.s32.totalorder %s72, %s73
      %p82 = scmp.eq.s32.totalorder %s27, 0
      %p83 = por %p81, %p82
      %p84 = scmp.ne.s32.totalorder %s72, %s73
      %p85 = scmp.eq.s32.totalorder %s28, 1
      %p86 = por %p84, %p85
      %p88 = scmp.ne.s32.totalorder %s73, %s87
      %p89 = scmp.eq.s32.totalorder %s28, 0
      %p90 = por %p88, %p89
      %s92 = sadd.s32 %s91, 1
      %p95 = scmp.eq.s32.totalorder %s22, 1
      %p96 = scmp.ne.s32.totalorder %s91, %s93
      %p97 = scmp.eq.s32.totalorder %s22, 0
      %p98 = por %p96, %p97
      %p99 = scmp.ne.s32.totalorder %s91, %s93
      %p100 = scmp.eq.s32.totalorder %s27, 1
      %p101 = por %p99, %p100
      %p102 = scmp.ne.s32.totalorder %s93, %s94
      %p103 = scmp.eq.s32.totalorder %s27, 0
      %p104 = por %p102, %p103
      %p105 = scmp.ne.s32.totalorder %s93, %s94
      %p106 = scmp.eq.s32.totalorder %s28, 1
      %p107 = por %p105, %p106
      %p109 = scmp.ne.s32.totalorder %s94, %s108
      %p110 = scmp.eq.s32.totalorder %s28, 0
      %p111 = por %p109, %p110
      %s113 = sadd.s32 %s112, 1
      %p116 = scmp.eq.s32.totalorder %s22, 1
      %p117 = scmp.ne.s32.totalorder %s112, %s114
      %p118 = scmp.eq.s32.totalorder %s22, 0
      %p119 = por %p117, %p118
      %p120 = scmp.ne.s32.totalorder %s112, %s114
      %p121 = scmp.eq.s32.totalorder %s27, 1
      %p122 = por %p120, %p121
      %p123 = scmp.ne.s32.totalorder %s114, %s115
      %p124 = scmp.eq.s32.totalorder %s27, 0
      %p125 = por %p123, %p124
      %p126 = scmp.ne.s32.totalorder %s114, %s115
      %p127 = scmp.eq.s32.totalorder %s28, 1
      %p128 = por %p126, %p127
      %p130 = scmp.ne.s32.totalorder %s115, %s129
      %p131 = scmp.eq.s32.totalorder %s28, 0
      %p132 = por %p130, %p131
      %s134 = sadd.s32 %s133, 1
      %p137 = scmp.eq.s32.totalorder %s22, 1
      %p138 = scmp.ne.s32.totalorder %s133, %s135
      %p139 = scmp.eq.s32.totalorder %s22, 0
      %p140 = por %p138, %p139
      %p141 = scmp.ne.s32.totalorder %s133, %s135
      %p142 = scmp.eq.s32.totalorder %s27, 1
      %p143 = por %p141, %p142
      %p144 = scmp.ne.s32.totalorder %s135, %s136
      %p145 = scmp.eq.s32.totalorder %s27, 0
      %p146 = por %p144, %p145
      %p147 = scmp.ne.s32.totalorder %s135, %s136
      %p148 = scmp.eq.s32.totalorder %s28, 1
      %p149 = por %p147, %p148
      %p151 = scmp.ne.s32.totalorder %s136, %s150
      %p152 = scmp.eq.s32.totalorder %s28, 0
      %p153 = por %p151, %p152
      %s155 = sadd.s32 %s154, 1
      %p158 = scmp.eq.s32.totalorder %s22, 1
      %p159 = scmp.ne.s32.totalorder %s154, %s156
      %p160 = scmp.eq.s32.totalorder %s22, 0
      %p161 = por %p159, %p160
      %p162 = scmp.ne.s32.totalorder %s154, %s156
      %p163 = scmp.eq.s32.totalorder %s27, 1
      %p164 = por %p162, %p163
      %p165 = scmp.ne.s32.totalorder %s156, %s157
      %p166 = scmp.eq.s32.totalorder %s27, 0
      %p167 = por %p165, %p166
      %p168 = scmp.ne.s32.totalorder %s156, %s157
      %p169 = scmp.eq.s32.totalorder %s28, 1
      %p170 = por %p168, %p169
      %p172 = scmp.ne.s32.totalorder %s157, %s171
      %p173 = scmp.eq.s32.totalorder %s28, 0
      %p174 = por %p172, %p173
      %s176 = sadd.s32 %s175, 1
      %p179 = scmp.eq.s32.totalorder %s22, 1
      %p180 = scmp.ne.s32.totalorder %s175, %s177
      %p181 = scmp.eq.s32.totalorder %s22, 0
      %p182 = por %p180, %p181
      %p183 = scmp.ne.s32.totalorder %s175, %s177
      %p184 = scmp.eq.s32.totalorder %s27, 1
      %p185 = por %p183, %p184
      %p186 = scmp.ne.s32.totalorder %s177, %s178
      %p187 = scmp.eq.s32.totalorder %s27, 0
      %p188 = por %p186, %p187
      %p189 = scmp.ne.s32.totalorder %s177, %s178
      %p190 = scmp.eq.s32.totalorder %s28, 1
      %p191 = por %p189, %p190
      %p193 = scmp.ne.s32.totalorder %s178, %s192
      %p194 = scmp.eq.s32.totalorder %s28, 0
      %p195 = por %p193, %p194
      %s197 = sadd.s32 %s196, 1
      %p200 = scmp.eq.s32.totalorder %s22, 1
      %p201 = scmp.ne.s32.totalorder %s196, %s198
      %p202 = scmp.eq.s32.totalorder %s22, 0
      %p203 = por %p201, %p202
      %p204 = scmp.ne.s32.totalorder %s196, %s198
      %p205 = scmp.eq.s32.totalorder %s27, 1
      %p206 = por %p204, %p205
      %p207 = scmp.ne.s32.totalorder %s198, %s199
      %p208 = scmp.eq.s32.totalorder %s27, 0
      %p209 = por %p207, %p208
      %p210 = scmp.ne.s32.totalorder %s198, %s199
      %p211 = scmp.eq.s32.totalorder %s28, 1
      %p212 = por %p210, %p211
      %p214 = scmp.ne.s32.totalorder %s199, %s213
      %p215 = scmp.eq.s32.totalorder %s28, 0
      %p216 = por %p214, %p215
      %s218 = sadd.s32 %s217, 1
      %p221 = scmp.eq.s32.totalorder %s22, 1
      %p222 = scmp.ne.s32.totalorder %s217, %s219
      %p223 = scmp.eq.s32.totalorder %s22, 0
      %p224 = por %p222, %p223
      %p225 = scmp.ne.s32.totalorder %s217, %s219
      %p226 = scmp.eq.s32.totalorder %s27, 1
      %p227 = por %p225, %p226
      %p228 = scmp.ne.s32.totalorder %s219, %s220
      %p229 = scmp.eq.s32.totalorder %s27, 0
      %p230 = por %p228, %p229
      %p231 = scmp.ne.s32.totalorder %s219, %s220
      %p232 = scmp.eq.s32.totalorder %s28, 1
      %p233 = por %p231, %p232
      %p235 = scmp.ne.s32.totalorder %s220, %s234
      %p236 = scmp.eq.s32.totalorder %s28, 0
      %p237 = por %p235, %p236
      %s239 = sadd.s32 %s238, 1
      %p242 = scmp.eq.s32.totalorder %s22, 1
      %p243 = scmp.ne.s32.totalorder %s238, %s240
      %p244 = scmp.eq.s32.totalorder %s22, 0
      %p245 = por %p243, %p244
      %p246 = scmp.ne.s32.totalorder %s238, %s240
      %p247 = scmp.eq.s32.totalorder %s27, 1
      %p248 = por %p246, %p247
      %p249 = scmp.ne.s32.totalorder %s240, %s241
      %p250 = scmp.eq.s32.totalorder %s27, 0
      %p251 = por %p249, %p250
      %p252 = scmp.ne.s32.totalorder %s240, %s241
      %p253 = scmp.eq.s32.totalorder %s28, 1
      %p254 = por %p252, %p253
      %p256 = scmp.ne.s32.totalorder %s241, %s255
      %p257 = scmp.eq.s32.totalorder %s28, 0
      %p258 = por %p256, %p257
      %s260 = sadd.s32 %s259, 1
      %p263 = scmp.eq.s32.totalorder %s22, 1
      %p264 = scmp.ne.s32.totalorder %s259, %s261
      %p265 = scmp.eq.s32.totalorder %s22, 0
      %p266 = por %p264, %p265
      %p267 = scmp.ne.s32.totalorder %s259, %s261
      %p268 = scmp.eq.s32.totalorder %s27, 1
      %p269 = por %p267, %p268
      %p270 = scmp.ne.s32.totalorder %s261, %s262
      %p271 = scmp.eq.s32.totalorder %s27, 0
      %p272 = por %p270, %p271
      %p273 = scmp.ne.s32.totalorder %s261, %s262
      %p274 = scmp.eq.s32.totalorder %s28, 1
      %p275 = por %p273, %p274
      %p277 = scmp.ne.s32.totalorder %s262, %s276
      %p278 = scmp.eq.s32.totalorder %s28, 0
      %p279 = por %p277, %p278
      %s280 = ssub.s32 %s29, %s41
      %s281 = ssub.s32 %s30, %s37
      %s282 = sor.u32 %s280, %s281
      %p283 = scmp.eq.s32.totalorder %s282, 0
      %s285 = sadd.s32 %s284, 1
      %s286 = scalar_select %p283, %s284, %s285
      %p289 = pneg %p283
      %p290 = scmp.eq.s32.totalorder %s22, 1
      %p291 = por %p289, %p290
      %p292 = scmp.ne.s32.totalorder %s284, %s287
      %p293 = scmp.eq.s32.totalorder %s22, 0
      %p294 = por %p292, %p293
      %p295 = scmp.ne.s32.totalorder %s284, %s287
      %p296 = scmp.eq.s32.totalorder %s27, 1
      %p297 = por %p295, %p296
      %p298 = scmp.ne.s32.totalorder %s287, %s288
      %p299 = scmp.eq.s32.totalorder %s27, 0
      %p300 = por %p298, %p299
      %p301 = scmp.ne.s32.totalorder %s287, %s288
      %p302 = scmp.eq.s32.totalorder %s28, 1
      %p303 = por %p301, %p302
      %p305 = scmp.ne.s32.totalorder %s288, %s304
      %p306 = scmp.eq.s32.totalorder %s28, 0
      %p307 = por %p305, %p306
      %p308 = scmp.le.s32.totalorder 1, %s22
      %p309 = scmp.lt.s32.totalorder %s22, 3
      %p310 = pnand %p308, %p309
      %p311 = pneg %p310
      // Predicated region
      $region9: #{tpu_custom_call.1} parent=5 // pred_check
        _
      $region10: #{tpu_custom_call.1} parent=5 // pred_check_branch
        %313 = sbr.rel (%p310) target = $region12
      $region11: #{tpu_custom_call.1} parent=5 // pred_region
        %s314 = ssub.s32 %s22, 1
        // Predicated region
        $region13: #{tpu_custom_call.1} parent=11 // pred_check
          %p315 = pneg %p83
        $region14: #{tpu_custom_call.1} parent=11 // pred_check_branch
          %317 = sbr.rel (%p315) target = $region16
        $region15: #{tpu_custom_call.1} parent=11 // pred_region
          _
        $region16: #{tpu_custom_call.1} parent=11 // pred_fallthru
          _
        // Predicated region
        $region17: #{tpu_custom_call.1} parent=11 // pred_check
          %p318 = pneg %p104
        $region18: #{tpu_custom_call.1} parent=11 // pred_check_branch
          %320 = sbr.rel (%p318) target = $region20
        $region19: #{tpu_custom_call.1} parent=11 // pred_region
          _
        $region20: #{tpu_custom_call.1} parent=11 // pred_fallthru
          _
        // Predicated region
        $region21: #{tpu_custom_call.1} parent=11 // pred_check
          %p321 = pneg %p125
        $region22: #{tpu_custom_call.1} parent=11 // pred_check_branch
          %323 = sbr.rel (%p321) target = $region24
        $region23: #{tpu_custom_call.1} parent=11 // pred_region
          _
        $region24: #{tpu_custom_call.1} parent=11 // pred_fallthru
          _
        // Predicated region
        $region25: #{tpu_custom_call.1} parent=11 // pred_check
          %p324 = pneg %p146
        $region26: #{tpu_custom_call.1} parent=11 // pred_check_branch
          %326 = sbr.rel (%p324) target = $region28
        $region27: #{tpu_custom_call.1} parent=11 // pred_region
          _
        $region28: #{tpu_custom_call.1} parent=11 // pred_fallthru
          _
        // Predicated region
        $region29: #{tpu_custom_call.1} parent=11 // pred_check
          %p327 = pneg %p167
        $region30: #{tpu_custom_call.1} parent=11 // pred_check_branch
          %329 = sbr.rel (%p327) target = $region32
        $region31: #{tpu_custom_call.1} parent=11 // pred_region
          _
        $region32: #{tpu_custom_call.1} parent=11 // pred_fallthru
          _
        // Predicated region
        $region33: #{tpu_custom_call.1} parent=11 // pred_check
          %p330 = pneg %p188
        $region34: #{tpu_custom_call.1} parent=11 // pred_check_branch
          %332 = sbr.rel (%p330) target = $region36
        $region35: #{tpu_custom_call.1} parent=11 // pred_region
          _
        $region36: #{tpu_custom_call.1} parent=11 // pred_fallthru
          _
        // Predicated region
        $region37: #{tpu_custom_call.1} parent=11 // pred_check
          %p333 = pneg %p209
        $region38: #{tpu_custom_call.1} parent=11 // pred_check_branch
          %335 = sbr.rel (%p333) target = $region40
        $region39: #{tpu_custom_call.1} parent=11 // pred_region
          _
        $region40: #{tpu_custom_call.1} parent=11 // pred_fallthru
          _
        // Predicated region
        $region41: #{tpu_custom_call.1} parent=11 // pred_check
          %p336 = pneg %p230
        $region42: #{tpu_custom_call.1} parent=11 // pred_check_branch
          %338 = sbr.rel (%p336) target = $region44
        $region43: #{tpu_custom_call.1} parent=11 // pred_region
          _
        $region44: #{tpu_custom_call.1} parent=11 // pred_fallthru
          _
        // Predicated region
        $region45: #{tpu_custom_call.1} parent=11 // pred_check
          %p339 = pneg %p251
        $region46: #{tpu_custom_call.1} parent=11 // pred_check_branch
          %341 = sbr.rel (%p339) target = $region48
        $region47: #{tpu_custom_call.1} parent=11 // pred_region
          _
        $region48: #{tpu_custom_call.1} parent=11 // pred_fallthru
          _
        // Predicated region
        $region49: #{tpu_custom_call.1} parent=11 // pred_check
          %p342 = pneg %p272
        $region50: #{tpu_custom_call.1} parent=11 // pred_check_branch
          %344 = sbr.rel (%p342) target = $region52
        $region51: #{tpu_custom_call.1} parent=11 // pred_region
          _
        $region52: #{tpu_custom_call.1} parent=11 // pred_fallthru
          _
      $region12: #{tpu_custom_call.1} parent=5 // pred_fallthru
        _
      %p345 = scmp.lt.s32.totalorder %s22, 2
      // Predicated region
      $region53: #{tpu_custom_call.1} parent=5 // pred_check
        %p346 = pneg %p345
      $region54: #{tpu_custom_call.1} parent=5 // pred_check_branch
        %348 = sbr.rel (%p346) target = $region56
      $region55: #{tpu_custom_call.1} parent=5 // pred_region
        // Predicated region
        $region57: #{tpu_custom_call.1} parent=55 // pred_check
          %p349 = pneg %p56
        $region58: #{tpu_custom_call.1} parent=55 // pred_check_branch
          %351 = sbr.rel (%p349) target = $region60
        $region59: #{tpu_custom_call.1} parent=55 // pred_region
          %p352 = scmp.lt.s32.totalorder %s29, 0
          %s353 = scalar_select %p352, %s29, 0
          %p354 = scmp.lt.s32.totalorder %s30, 1
          %s355 = scalar_select %p354, %s30, 1
          %s356 = smul.addr %s355, 4
          %s357 = smul.addr %s353, 8
          %s358 = sadd.s32 %s356, %s357
          %s359 = scalar_lea.vmem %s0, %s358
        $region60: #{tpu_custom_call.1} parent=55 // pred_fallthru
          _
      $region56: #{tpu_custom_call.1} parent=5 // pred_fallthru
        _
      %p360 = scmp.le.s32.totalorder 1, %s22
      %p361 = scmp.lt.s32.totalorder %s22, 3
      %p362 = pnand %p360, %p361
      %p363 = pneg %p362
      // Predicated region
      $region61: #{tpu_custom_call.1} parent=5 // pred_check
        _
      $region62: #{tpu_custom_call.1} parent=5 // pred_check_branch
        %365 = sbr.rel (%p362) target = $region64
      $region63: #{tpu_custom_call.1} parent=5 // pred_region
        %s366 = ssub.s32 %s22, 1
        %p367 = scmp.lt.s32.totalorder %s31, 0
        %s368 = scalar_select %p367, %s31, 0
        %p369 = scmp.lt.s32.totalorder %s32, 1
        %s370 = scalar_select %p369, %s32, 1
        %s371 = smul.addr %s370, 4
        %s372 = smul.addr %s368, 8
        %s373 = sadd.s32 %s371, %s372
        %s374 = scalar_lea.vmem %s0, %s373
        %p375 = pneg %p62
        %p376 = pneg %p59
        %p377 = pneg %p83
        %p378 = pneg %p80
        %p379 = pneg %p104
        %p380 = pneg %p101
        %p381 = pneg %p125
        %p382 = pneg %p122
        %p383 = pneg %p146
        %p384 = pneg %p143
        %p385 = pneg %p167
        %p386 = pneg %p164
        %p387 = pneg %p188
        %p388 = pneg %p185
        %p389 = pneg %p209
        %p390 = pneg %p206
        %p391 = pneg %p230
        %p392 = pneg %p227
        %p393 = pneg %p251
        %p394 = pneg %p248
        %p395 = pneg %p272
        %p396 = pneg %p269
        %p397 = pneg %p300
        %p398 = pneg %p297
        %s399 = sand.u32 %s287, 1
        %s400 = scalar_lea.sflag [#allocation4], %s399
        %s401 = sand.u32 %s287, 1
        %s402 = smul.addr %s401, 2
        %s403 = scalar_lea.vmem [#allocation3], %s402
        %p404 = scmp.lt.s32.totalorder %s31, 0
        %s405 = scalar_select %p404, %s31, 0
        %p406 = scmp.lt.s32.totalorder %s32, 1
        %s407 = scalar_select %p406, %s32, 1
        %s408 = smul.addr %s407, 4
        %s409 = smul.addr %s405, 8
        %s410 = sadd.s32 %s408, %s409
        %s411 = scalar_lea.vmem %s0, %s410
        %v412 = vld [vmem:[%s411] sm:$0xf]
        %v413 = vlaneseq
        %v414 = vand.u32 %v413, 127
        %v415 = vadd.s32 %v414, 128
        %v416 = vadd.s32 %v414, 256
        %v417 = vadd.s32 %v414, 384
        %vm418 = vcmp.lt.s32.totalorder %v414, 0
        %v419 = vsub.s32 0, %v414
        %v420 = vsel %vm418, %v419, %v414
        %v421 = vshrl.u32 %v420, 8
        %v422 = vand.u32 %v420, 255
        %v423 = vsub.s32 0, %v422
        %v424 = vsel %vm418, %v423, %v422
        %vm425 = vcmp.lt.s32.totalorder %v415, 0
        %v426 = vsub.s32 0, %v415
        %v427 = vsel %vm425, %v426, %v415
        %v428 = vshrl.u32 %v427, 8
        %v429 = vand.u32 %v427, 255
        %v430 = vsub.s32 0, %v429
        %v431 = vsel %vm425, %v430, %v429
        %vm432 = vcmp.lt.s32.totalorder %v416, 0
        %v433 = vsub.s32 0, %v416
        %v434 = vsel %vm432, %v433, %v416
        %v435 = vshrl.u32 %v434, 8
        %v436 = vand.u32 %v434, 255
        %v437 = vsub.s32 0, %v436
        %v438 = vsel %vm432, %v437, %v436
        %vm439 = vcmp.lt.s32.totalorder %v417, 0
        %v440 = vsub.s32 0, %v417
        %v441 = vsel %vm439, %v440, %v417
        %v442 = vshrl.u32 %v441, 8
        %v443 = vand.u32 %v441, 255
        %v444 = vsub.s32 0, %v443
        %v445 = vsel %vm439, %v444, %v443
        %vm446 = vcmp.ne.s32.totalorder %v424, 0
        %vm447 = vcmp.ne.s32.totalorder %v431, 0
        %vm448 = vcmp.ne.s32.totalorder %v438, 0
        %vm449 = vcmp.ne.s32.totalorder %v445, 0
        %vm450 = vcmp.lt.s32.totalorder %v424, 0
        %vm451 = vcmp.lt.s32.totalorder %v431, 0
        %vm452 = vcmp.lt.s32.totalorder %v438, 0
        %vm453 = vcmp.lt.s32.totalorder %v445, 0
        %vm454 = vmand %vm450, %vm446
        %vm455 = vmand %vm451, %vm447
        %vm456 = vmand %vm452, %vm448
        %vm457 = vmand %vm453, %vm449
        %v458 = vadd.s32 %v424, 256
        %v459 = vadd.s32 %v431, 256
        %v460 = vadd.s32 %v438, 256
        %v461 = vadd.s32 %v445, 256
        %v462 = vsel %vm454, %v458, %v424
        %v463 = vsel %vm455, %v459, %v431
        %v464 = vsel %vm456, %v460, %v438
        %v465 = vsel %vm457, %v461, %v445
        %s466 = smul.u32 %s32, 128
        %s467 = ssub.s32 128, %s466
        %v468 = vstv %s467
        %vm469 = vcmp.ge.s32.totalorder %v462, %v468
        %vm470 = vcmp.ge.s32.totalorder %v463, %v468
        %vm471 = vcmp.ge.s32.totalorder %v464, %v468
        %vm472 = vcmp.ge.s32.totalorder %v465, %v468
        %v473 = vld [vmem:[%s1] sm:$0xff]
        %475 = vset.pattern.permute.xlu0 0
        %476 = vperm.xlu0 %475, %v473
        %v477 = vpop.permute.xlu0 %476
        %v480 = vlaneseq
        %v481 = vshrl.u32 %v480, 7
        %v482 = vsub.s32 0, %v481
        %v483 = vrot.slane %v412, %v482
        %v484 = vlaneseq
        %v485 = vshrl.u32 %v484, 7
        %v486 = vsub.s32 1, %v485
        %v487 = vrot.slane %v412, %v486
        %v488 = vlaneseq
        %v489 = vshrl.u32 %v488, 7
        %v490 = vsub.s32 2, %v489
        %v491 = vrot.slane %v412, %v490
        %v492 = vlaneseq
        %v493 = vshrl.u32 %v492, 7
        %v494 = vsub.s32 3, %v493
        %v495 = vrot.slane %v412, %v494
        %v500 = vmul.f32 %v477, %v483
        %v501 = vmul.f32 %v477, %v487
        %v502 = vmul.f32 %v477, %v491
        %v503 = vmul.f32 %v477, %v495
        %v504 = vld [vmem:[%s2] sm:$0xff]
        %506 = vset.pattern.permute.xlu0 0
        %507 = vperm.xlu0 %506, %v504
        %v508 = vpop.permute.xlu0 %507
        %v510 = vadd.f32 %v500, %v508
        %v511 = vadd.f32 %v501, %v508
        %v512 = vadd.f32 %v502, %v508
        %v513 = vadd.f32 %v503, %v508
        %v514 = vsel %vm469, %v510, 0.0
        %v515 = vsel %vm470, %v511, 0.0
        %v516 = vsel %vm471, %v512, 0.0
        %v517 = vsel %vm472, %v513, 0.0
        %518 = vrot.lane.b32.xlu0 %v514, 2
        %v519 = vpop.permute.xlu0 %518
        %520 = vrot.lane.b32.xlu0 %v515, 2
        %v521 = vpop.permute.xlu0 %520
        %522 = vrot.lane.b32.xlu0 %v516, 2
        %v523 = vpop.permute.xlu0 %522
        %524 = vrot.lane.b32.xlu0 %v517, 2
        %v525 = vpop.permute.xlu0 %524
        %vm526 = vcmp.lt.s32.totalorder %v414, 2
        %v527 = vsel %vm526, %v523, %v525
        %v528 = vsel %vm526, %v521, %v523
        %v529 = vsel %vm526, %v519, %v521
        %v530 = vsel %vm526, %v525, %v519
        %531 = vrot.lane.b32.xlu0 %v514, 1
        %v532 = vpop.permute.xlu0 %531
        %533 = vrot.lane.b32.xlu0 %v515, 1
        %v534 = vpop.permute.xlu0 %533
        %535 = vrot.lane.b32.xlu0 %v516, 1
        %v536 = vpop.permute.xlu0 %535
        %537 = vrot.lane.b32.xlu0 %v517, 1
        %v538 = vpop.permute.xlu0 %537
        %vm539 = vcmp.lt.s32.totalorder %v414, 1
        %v540 = vsel %vm539, %v536, %v538
        %v541 = vsel %vm539, %v534, %v536
        %v542 = vsel %vm539, %v532, %v534
        %v543 = vsel %vm539, %v538, %v532
        %v544 = vld [vmem:[%s3] sm:$0xff]
        %v545 = vld [vmem:[%s4] sm:$0xff]
        %547 = vset.pattern.permute.xlu0 0
        %548 = vperm.xlu0 %547, %v545
        %v549 = vpop.permute.xlu0 %548
        %vm551 = vcmask 195584
        %v553 = vsel %vm551, %v544, 0
        %555 = vmatprep.subr.mxu0 %v529
        %556 = vmatpush1.msra.mxu0 %v530
        %557 = vmatprep.subr.mxu0 %v542
        %558 = vmatpush1.msra.mxu0 %v543
        %559 = vmatprep.subr.mxu0 %v515
        %560 = vmatpush1.msra.mxu0 %v514
        %561 = vmatprep.subr.mxu0 0.0
        %562 = vmatpush1.msra.mxu0 0.0
        %563 = vmatprep.subr.mxu0 0.0
        %564 = vmatpush1.msra.mxu0 0.0
        %565 = vmatprep.subr.mxu0 0.0
        %566 = vmatpush1.msra.mxu0 0.0
        %567 = vmatprep.subr.mxu0 0.0
        %568 = vmatpush1.msra.mxu0 0.0
        %569 = vmatprep.subr.mxu0 0.0
        %570 = vmatpush1.msra.mxu0 0.0
        %571 = vmatprep.subr.mxu0 0.0
        %572 = vmatpush1.msra.mxu0 0.0
        %573 = vmatprep.subr.mxu0 0.0
        %574 = vmatpush1.msra.mxu0 0.0
        %575 = vmatprep.subr.mxu0 0.0
        %576 = vmatpush1.msra.mxu0 0.0
        %577 = vmatprep.subr.mxu0 0.0
        %578 = vmatpush1.msra.mxu0 0.0
        %579 = vmatprep.subr.mxu0 0.0
        %580 = vmatpush1.msra.mxu0 0.0
        %581 = vmatprep.subr.mxu0 0.0
        %582 = vmatpush1.msra.mxu0 0.0
        %583 = vmatprep.subr.mxu0 0.0
        %584 = vmatpush1.msra.mxu0 0.0
        %585 = vmatprep.subr.mxu0 0.0
        %586 = vmatpush1.msra.mxu0 0.0
        %587 = vmatprep.subr.mxu0 0.0
        %588 = vmatpush1.msra.mxu0 0.0
        %589 = vmatprep.subr.mxu0 0.0
        %590 = vmatpush1.msra.mxu0 0.0
        %591 = vmatprep.subr.mxu0 0.0
        %592 = vmatpush1.msra.mxu0 0.0
        %593 = vmatprep.subr.mxu0 0.0
        %594 = vmatpush1.msra.mxu0 0.0
        %595 = vmatprep.subr.mxu0 0.0
        %596 = vmatpush1.msra.mxu0 0.0
        %597 = vmatprep.subr.mxu0 0.0
        %598 = vmatpush1.msra.mxu0 0.0
        %599 = vmatprep.subr.mxu0 0.0
        %600 = vmatpush1.msra.mxu0 0.0
        %601 = vmatprep.subr.mxu0 0.0
        %602 = vmatpush1.msra.mxu0 0.0
        %603 = vmatprep.subr.mxu0 0.0
        %604 = vmatpush1.msra.mxu0 0.0
        %605 = vmatprep.subr.mxu0 0.0
        %606 = vmatpush1.msra.mxu0 0.0
        %607 = vmatprep.subr.mxu0 0.0
        %608 = vmatpush1.msra.mxu0 0.0
        %609 = vmatprep.subr.mxu0 0.0
        %610 = vmatpush1.msra.mxu0 0.0
        %611 = vmatprep.subr.mxu0 0.0
        %612 = vmatpush1.msra.mxu0 0.0
        %613 = vmatprep.subr.mxu0 0.0
        %614 = vmatpush1.msra.mxu0 0.0
        %615 = vmatprep.subr.mxu0 0.0
        %616 = vmatpush1.msra.mxu0 0.0
        %617 = vmatprep.subr.mxu0 0.0
        %618 = vmatpush1.msra.mxu0 0.0
        %619 = vmatprep.mubr.f32.mxu0 0.0
        %620 = vmatmul.mubr.f32.gmra.mrb[0].mxu0 %v553
        %v621 = vpop.f32.mrb[0].mxu0
        %v622 = vadd.f32 %v549, %v621
        %v623 = vpop.f32.mrb[0].mxu0
        %v624 = vadd.f32 %v549, %v623
        %625 = vdwg.mxu0
        %626 = vmatprep.subr.mxu0 %v527
        %627 = vmatpush1.msra.mxu0 %v528
        %628 = vmatprep.subr.mxu0 %v540
        %629 = vmatpush1.msra.mxu0 %v541
        %630 = vmatprep.subr.mxu0 %v517
        %631 = vmatpush1.msra.mxu0 %v516
        %632 = vmatprep.subr.mxu0 0.0
        %633 = vmatpush1.msra.mxu0 0.0
        %634 = vmatprep.subr.mxu0 0.0
        %635 = vmatpush1.msra.mxu0 0.0
        %636 = vmatprep.subr.mxu0 0.0
        %637 = vmatpush1.msra.mxu0 0.0
        %638 = vmatprep.subr.mxu0 0.0
        %639 = vmatpush1.msra.mxu0 0.0
        %640 = vmatprep.subr.mxu0 0.0
        %641 = vmatpush1.msra.mxu0 0.0
        %642 = vmatprep.subr.mxu0 0.0
        %643 = vmatpush1.msra.mxu0 0.0
        %644 = vmatprep.subr.mxu0 0.0
        %645 = vmatpush1.msra.mxu0 0.0
        %646 = vmatprep.subr.mxu0 0.0
        %647 = vmatpush1.msra.mxu0 0.0
        %648 = vmatprep.subr.mxu0 0.0
        %649 = vmatpush1.msra.mxu0 0.0
        %650 = vmatprep.subr.mxu0 0.0
        %651 = vmatpush1.msra.mxu0 0.0
        %652 = vmatprep.subr.mxu0 0.0
        %653 = vmatpush1.msra.mxu0 0.0
        %654 = vmatprep.subr.mxu0 0.0
        %655 = vmatpush1.msra.mxu0 0.0
        %656 = vmatprep.subr.mxu0 0.0
        %657 = vmatpush1.msra.mxu0 0.0
        %658 = vmatprep.subr.mxu0 0.0
        %659 = vmatpush1.msra.mxu0 0.0
        %660 = vmatprep.subr.mxu0 0.0
        %661 = vmatpush1.msra.mxu0 0.0
        %662 = vmatprep.subr.mxu0 0.0
        %663 = vmatpush1.msra.mxu0 0.0
        %664 = vmatprep.subr.mxu0 0.0
        %665 = vmatpush1.msra.mxu0 0.0
        %666 = vmatprep.subr.mxu0 0.0
        %667 = vmatpush1.msra.mxu0 0.0
        %668 = vmatprep.subr.mxu0 0.0
        %669 = vmatpush1.msra.mxu0 0.0
        %670 = vmatprep.subr.mxu0 0.0
        %671 = vmatpush1.msra.mxu0 0.0
        %672 = vmatprep.subr.mxu0 0.0
        %673 = vmatpush1.msra.mxu0 0.0
        %674 = vmatprep.subr.mxu0 0.0
        %675 = vmatpush1.msra.mxu0 0.0
        %676 = vmatprep.subr.mxu0 0.0
        %677 = vmatpush1.msra.mxu0 0.0
        %678 = vmatprep.subr.mxu0 0.0
        %679 = vmatpush1.msra.mxu0 0.0
        %680 = vmatprep.subr.mxu0 0.0
        %681 = vmatpush1.msra.mxu0 0.0
        %682 = vmatprep.subr.mxu0 0.0
        %683 = vmatpush1.msra.mxu0 0.0
        %684 = vmatprep.subr.mxu0 0.0
        %685 = vmatpush1.msra.mxu0 0.0
        %686 = vmatprep.subr.mxu0 0.0
        %687 = vmatpush1.msra.mxu0 0.0
        %688 = vmatprep.subr.mxu0 0.0
        %689 = vmatpush1.msra.mxu0 0.0
        %690 = vmatprep.mubr.f32.mxu0 0.0
        %691 = vmatmul.mubr.f32.gmra.mrb[0].mxu0 %v553
        %v692 = vpop.f32.mrb[0].mxu0
        %v693 = vadd.f32 %v549, %v692
        %v694 = vpop.f32.mrb[0].mxu0
        %v695 = vadd.f32 %v549, %v694
        %696 = vdwg.mxu0
        %v697 = vld [vmem:[%s5] sm:$0xff]
        %v698 = vld [vmem:[%s6] sm:$0xff]
        %700 = vset.pattern.permute.xlu0 0
        %701 = vperm.xlu0 %700, %v698
        %v702 = vpop.permute.xlu0 %701
        %v705 = vsel %vm551, %v697, 0
        %707 = vmatprep.subr.mxu0 %v529
        %708 = vmatpush1.msra.mxu0 %v530
        %709 = vmatprep.subr.mxu0 %v542
        %710 = vmatpush1.msra.mxu0 %v543
        %711 = vmatprep.subr.mxu0 %v515
        %712 = vmatpush1.msra.mxu0 %v514
        %713 = vmatprep.subr.mxu0 0.0
        %714 = vmatpush1.msra.mxu0 0.0
        %715 = vmatprep.subr.mxu0 0.0
        %716 = vmatpush1.msra.mxu0 0.0
        %717 = vmatprep.subr.mxu0 0.0
        %718 = vmatpush1.msra.mxu0 0.0
        %719 = vmatprep.subr.mxu0 0.0
        %720 = vmatpush1.msra.mxu0 0.0
        %721 = vmatprep.subr.mxu0 0.0
        %722 = vmatpush1.msra.mxu0 0.0
        %723 = vmatprep.subr.mxu0 0.0
        %724 = vmatpush1.msra.mxu0 0.0
        %725 = vmatprep.subr.mxu0 0.0
        %726 = vmatpush1.msra.mxu0 0.0
        %727 = vmatprep.subr.mxu0 0.0
        %728 = vmatpush1.msra.mxu0 0.0
        %729 = vmatprep.subr.mxu0 0.0
        %730 = vmatpush1.msra.mxu0 0.0
        %731 = vmatprep.subr.mxu0 0.0
        %732 = vmatpush1.msra.mxu0 0.0
        %733 = vmatprep.subr.mxu0 0.0
        %734 = vmatpush1.msra.mxu0 0.0
        %735 = vmatprep.subr.mxu0 0.0
        %736 = vmatpush1.msra.mxu0 0.0
        %737 = vmatprep.subr.mxu0 0.0
        %738 = vmatpush1.msra.mxu0 0.0
        %739 = vmatprep.subr.mxu0 0.0
        %740 = vmatpush1.msra.mxu0 0.0
        %741 = vmatprep.subr.mxu0 0.0
        %742 = vmatpush1.msra.mxu0 0.0
        %743 = vmatprep.subr.mxu0 0.0
        %744 = vmatpush1.msra.mxu0 0.0
        %745 = vmatprep.subr.mxu0 0.0
        %746 = vmatpush1.msra.mxu0 0.0
        %747 = vmatprep.subr.mxu0 0.0
        %748 = vmatpush1.msra.mxu0 0.0
        %749 = vmatprep.subr.mxu0 0.0
        %750 = vmatpush1.msra.mxu0 0.0
        %751 = vmatprep.subr.mxu0 0.0
        %752 = vmatpush1.msra.mxu0 0.0
        %753 = vmatprep.subr.mxu0 0.0
        %754 = vmatpush1.msra.mxu0 0.0
        %755 = vmatprep.subr.mxu0 0.0
        %756 = vmatpush1.msra.mxu0 0.0
        %757 = vmatprep.subr.mxu0 0.0
        %758 = vmatpush1.msra.mxu0 0.0
        %759 = vmatprep.subr.mxu0 0.0
        %760 = vmatpush1.msra.mxu0 0.0
        %761 = vmatprep.subr.mxu0 0.0
        %762 = vmatpush1.msra.mxu0 0.0
        %763 = vmatprep.subr.mxu0 0.0
        %764 = vmatpush1.msra.mxu0 0.0
        %765 = vmatprep.subr.mxu0 0.0
        %766 = vmatpush1.msra.mxu0 0.0
        %767 = vmatprep.subr.mxu0 0.0
        %768 = vmatpush1.msra.mxu0 0.0
        %769 = vmatprep.subr.mxu0 0.0
        %770 = vmatpush1.msra.mxu0 0.0
        %771 = vmatprep.mubr.f32.mxu0 0.0
        %772 = vmatmul.mubr.f32.gmra.mrb[0].mxu0 %v705
        %v773 = vpop.f32.mrb[0].mxu0
        %v774 = vadd.f32 %v702, %v773
        %v775 = vpop.f32.mrb[0].mxu0
        %v776 = vadd.f32 %v702, %v775
        %777 = vdwg.mxu0
        %778 = vmatprep.subr.mxu0 %v527
        %779 = vmatpush1.msra.mxu0 %v528
        %780 = vmatprep.subr.mxu0 %v540
        %781 = vmatpush1.msra.mxu0 %v541
        %782 = vmatprep.subr.mxu0 %v517
        %783 = vmatpush1.msra.mxu0 %v516
        %784 = vmatprep.subr.mxu0 0.0
        %785 = vmatpush1.msra.mxu0 0.0
        %786 = vmatprep.subr.mxu0 0.0
        %787 = vmatpush1.msra.mxu0 0.0
        %788 = vmatprep.subr.mxu0 0.0
        %789 = vmatpush1.msra.mxu0 0.0
        %790 = vmatprep.subr.mxu0 0.0
        %791 = vmatpush1.msra.mxu0 0.0
        %792 = vmatprep.subr.mxu0 0.0
        %793 = vmatpush1.msra.mxu0 0.0
        %794 = vmatprep.subr.mxu0 0.0
        %795 = vmatpush1.msra.mxu0 0.0
        %796 = vmatprep.subr.mxu0 0.0
        %797 = vmatpush1.msra.mxu0 0.0
        %798 = vmatprep.subr.mxu0 0.0
        %799 = vmatpush1.msra.mxu0 0.0
        %800 = vmatprep.subr.mxu0 0.0
        %801 = vmatpush1.msra.mxu0 0.0
        %802 = vmatprep.subr.mxu0 0.0
        %803 = vmatpush1.msra.mxu0 0.0
        %804 = vmatprep.subr.mxu0 0.0
        %805 = vmatpush1.msra.mxu0 0.0
        %806 = vmatprep.subr.mxu0 0.0
        %807 = vmatpush1.msra.mxu0 0.0
        %808 = vmatprep.subr.mxu0 0.0
        %809 = vmatpush1.msra.mxu0 0.0
        %810 = vmatprep.subr.mxu0 0.0
        %811 = vmatpush1.msra.mxu0 0.0
        %812 = vmatprep.subr.mxu0 0.0
        %813 = vmatpush1.msra.mxu0 0.0
        %814 = vmatprep.subr.mxu0 0.0
        %815 = vmatpush1.msra.mxu0 0.0
        %816 = vmatprep.subr.mxu0 0.0
        %817 = vmatpush1.msra.mxu0 0.0
        %818 = vmatprep.subr.mxu0 0.0
        %819 = vmatpush1.msra.mxu0 0.0
        %820 = vmatprep.subr.mxu0 0.0
        %821 = vmatpush1.msra.mxu0 0.0
        %822 = vmatprep.subr.mxu0 0.0
        %823 = vmatpush1.msra.mxu0 0.0
        %824 = vmatprep.subr.mxu0 0.0
        %825 = vmatpush1.msra.mxu0 0.0
        %826 = vmatprep.subr.mxu0 0.0
        %827 = vmatpush1.msra.mxu0 0.0
        %828 = vmatprep.subr.mxu0 0.0
        %829 = vmatpush1.msra.mxu0 0.0
        %830 = vmatprep.subr.mxu0 0.0
        %831 = vmatpush1.msra.mxu0 0.0
        %832 = vmatprep.subr.mxu0 0.0
        %833 = vmatpush1.msra.mxu0 0.0
        %834 = vmatprep.subr.mxu0 0.0
        %835 = vmatpush1.msra.mxu0 0.0
        %836 = vmatprep.subr.mxu0 0.0
        %837 = vmatpush1.msra.mxu0 0.0
        %838 = vmatprep.subr.mxu0 0.0
        %839 = vmatpush1.msra.mxu0 0.0
        %840 = vmatprep.subr.mxu0 0.0
        %841 = vmatpush1.msra.mxu0 0.0
        %842 = vmatprep.mubr.f32.mxu0 0.0
        %843 = vmatmul.mubr.f32.gmra.mrb[0].mxu0 %v705
        %v844 = vpop.f32.mrb[0].mxu0
        %v845 = vadd.f32 %v702, %v844
        %v846 = vpop.f32.mrb[0].mxu0
        %v847 = vadd.f32 %v702, %v846
        %848 = vdwg.mxu0
        %v849 = vtanh.pop %v622
        %v850 = vtanh.pop %v624
        %v851 = vtanh.pop %v693
        %v852 = vtanh.pop %v695
        %v853 = vmul.f32 %v774, 0.5
        %v854 = vmul.f32 %v776, 0.5
        %v855 = vmul.f32 %v845, 0.5
        %v856 = vmul.f32 %v847, 0.5
        %v857 = vtanh.pop %v853
        %v858 = vtanh.pop %v854
        %v859 = vtanh.pop %v855
        %v860 = vtanh.pop %v856
        %v861 = vmul.f32 %v857, 0.5
        %v862 = vmul.f32 %v858, 0.5
        %v863 = vmul.f32 %v859, 0.5
        %v864 = vmul.f32 %v860, 0.5
        %v865 = vadd.f32 %v861, 0.5
        %v866 = vadd.f32 %v862, 0.5
        %v867 = vadd.f32 %v863, 0.5
        %v868 = vadd.f32 %v864, 0.5
        %v869 = vmul.f32 %v849, %v865
        %v870 = vmul.f32 %v850, %v866
        %v871 = vmul.f32 %v851, %v867
        %v872 = vmul.f32 %v852, %v868
        %v873 = vld [vmem:[%s9] sm:$0xff]
        %875 = vset.pattern.permute.xlu0 0
        %876 = vperm.xlu0 %875, %v873
        %v877 = vpop.permute.xlu0 %876
        %v879 = vmul.f32 %v877, %v870
        %v880 = vmul.f32 %v877, %v872
        %v881 = vadd.f32 %v879, 0.0
        %v882 = vadd.f32 %v880, 0.0
        %v883 = vld [vmem:[%s7] sm:$0xff]
        %v884 = vld [vmem:[%s8] sm:$0xff]
        %886 = vset.pattern.permute.xlu0 0
        %887 = vperm.xlu0 %886, %v884
        %v888 = vpop.permute.xlu0 %887
        %vm890 = vcmask 64512
        %v892 = vsel %vm890, %v883, 0
        %894 = vmatprep.subr.mxu0 %v870
        %895 = vmatpush1.msra.mxu0 %v869
        %896 = vmatprep.subr.mxu0 0.0
        %897 = vmatpush1.msra.mxu0 0.0
        %898 = vmatprep.subr.mxu0 0.0
        %899 = vmatpush1.msra.mxu0 0.0
        %900 = vmatprep.subr.mxu0 0.0
        %901 = vmatpush1.msra.mxu0 0.0
        %902 = vmatprep.subr.mxu0 0.0
        %903 = vmatpush1.msra.mxu0 0.0
        %904 = vmatprep.subr.mxu0 0.0
        %905 = vmatpush1.msra.mxu0 0.0
        %906 = vmatprep.subr.mxu0 0.0
        %907 = vmatpush1.msra.mxu0 0.0
        %908 = vmatprep.subr.mxu0 0.0
        %909 = vmatpush1.msra.mxu0 0.0
        %910 = vmatprep.subr.mxu0 0.0
        %911 = vmatpush1.msra.mxu0 0.0
        %912 = vmatprep.subr.mxu0 0.0
        %913 = vmatpush1.msra.mxu0 0.0
        %914 = vmatprep.subr.mxu0 0.0
        %915 = vmatpush1.msra.mxu0 0.0
        %916 = vmatprep.subr.mxu0 0.0
        %917 = vmatpush1.msra.mxu0 0.0
        %918 = vmatprep.subr.mxu0 0.0
        %919 = vmatpush1.msra.mxu0 0.0
        %920 = vmatprep.subr.mxu0 0.0
        %921 = vmatpush1.msra.mxu0 0.0
        %922 = vmatprep.subr.mxu0 0.0
        %923 = vmatpush1.msra.mxu0 0.0
        %924 = vmatprep.subr.mxu0 0.0
        %925 = vmatpush1.msra.mxu0 0.0
        %926 = vmatprep.subr.mxu0 0.0
        %927 = vmatpush1.msra.mxu0 0.0
        %928 = vmatprep.subr.mxu0 0.0
        %929 = vmatpush1.msra.mxu0 0.0
        %930 = vmatprep.subr.mxu0 0.0
        %931 = vmatpush1.msra.mxu0 0.0
        %932 = vmatprep.subr.mxu0 0.0
        %933 = vmatpush1.msra.mxu0 0.0
        %934 = vmatprep.subr.mxu0 0.0
        %935 = vmatpush1.msra.mxu0 0.0
        %936 = vmatprep.subr.mxu0 0.0
        %937 = vmatpush1.msra.mxu0 0.0
        %938 = vmatprep.subr.mxu0 0.0
        %939 = vmatpush1.msra.mxu0 0.0
        %940 = vmatprep.subr.mxu0 0.0
        %941 = vmatpush1.msra.mxu0 0.0
        %942 = vmatprep.subr.mxu0 0.0
        %943 = vmatpush1.msra.mxu0 0.0
        %944 = vmatprep.subr.mxu0 0.0
        %945 = vmatpush1.msra.mxu0 0.0
        %946 = vmatprep.subr.mxu0 0.0
        %947 = vmatpush1.msra.mxu0 0.0
        %948 = vmatprep.subr.mxu0 0.0
        %949 = vmatpush1.msra.mxu0 0.0
        %950 = vmatprep.subr.mxu0 0.0
        %951 = vmatpush1.msra.mxu0 0.0
        %952 = vmatprep.subr.mxu0 0.0
        %953 = vmatpush1.msra.mxu0 0.0
        %954 = vmatprep.subr.mxu0 0.0
        %955 = vmatpush1.msra.mxu0 0.0
        %956 = vmatprep.subr.mxu0 0.0
        %957 = vmatpush1.msra.mxu0 0.0
        %958 = vmatprep.mubr.f32.mxu0 0.0
        %959 = vmatmul.mubr.f32.gmra.mrb[0].mxu0 %v892
        %v960 = vpop.f32.mrb[0].mxu0
        %v961 = vadd.f32 %v888, %v960
        %v962 = vpop.f32.mrb[0].mxu0
        %v963 = vadd.f32 %v888, %v962
        %964 = vdwg.mxu0
        %965 = vmatprep.subr.mxu0 %v872
        %966 = vmatpush1.msra.mxu0 %v871
        %967 = vmatprep.subr.mxu0 0.0
        %968 = vmatpush1.msra.mxu0 0.0
        %969 = vmatprep.subr.mxu0 0.0
        %970 = vmatpush1.msra.mxu0 0.0
        %971 = vmatprep.subr.mxu0 0.0
        %972 = vmatpush1.msra.mxu0 0.0
        %973 = vmatprep.subr.mxu0 0.0
        %974 = vmatpush1.msra.mxu0 0.0
        %975 = vmatprep.subr.mxu0 0.0
        %976 = vmatpush1.msra.mxu0 0.0
        %977 = vmatprep.subr.mxu0 0.0
        %978 = vmatpush1.msra.mxu0 0.0
        %979 = vmatprep.subr.mxu0 0.0
        %980 = vmatpush1.msra.mxu0 0.0
        %981 = vmatprep.subr.mxu0 0.0
        %982 = vmatpush1.msra.mxu0 0.0
        %983 = vmatprep.subr.mxu0 0.0
        %984 = vmatpush1.msra.mxu0 0.0
        %985 = vmatprep.subr.mxu0 0.0
        %986 = vmatpush1.msra.mxu0 0.0
        %987 = vmatprep.subr.mxu0 0.0
        %988 = vmatpush1.msra.mxu0 0.0
        %989 = vmatprep.subr.mxu0 0.0
        %990 = vmatpush1.msra.mxu0 0.0
        %991 = vmatprep.subr.mxu0 0.0
        %992 = vmatpush1.msra.mxu0 0.0
        %993 = vmatprep.subr.mxu0 0.0
        %994 = vmatpush1.msra.mxu0 0.0
        %995 = vmatprep.subr.mxu0 0.0
        %996 = vmatpush1.msra.mxu0 0.0
        %997 = vmatprep.subr.mxu0 0.0
        %998 = vmatpush1.msra.mxu0 0.0
        %999 = vmatprep.subr.mxu0 0.0
        %1000 = vmatpush1.msra.mxu0 0.0
        %1001 = vmatprep.subr.mxu0 0.0
        %1002 = vmatpush1.msra.mxu0 0.0
        %1003 = vmatprep.subr.mxu0 0.0
        %1004 = vmatpush1.msra.mxu0 0.0
        %1005 = vmatprep.subr.mxu0 0.0
        %1006 = vmatpush1.msra.mxu0 0.0
        %1007 = vmatprep.subr.mxu0 0.0
        %1008 = vmatpush1.msra.mxu0 0.0
        %1009 = vmatprep.subr.mxu0 0.0
        %1010 = vmatpush1.msra.mxu0 0.0
        %1011 = vmatprep.subr.mxu0 0.0
        %1012 = vmatpush1.msra.mxu0 0.0
        %1013 = vmatprep.subr.mxu0 0.0
        %1014 = vmatpush1.msra.mxu0 0.0
        %1015 = vmatprep.subr.mxu0 0.0
        %1016 = vmatpush1.msra.mxu0 0.0
        %1017 = vmatprep.subr.mxu0 0.0
        %1018 = vmatpush1.msra.mxu0 0.0
        %1019 = vmatprep.subr.mxu0 0.0
        %1020 = vmatpush1.msra.mxu0 0.0
        %1021 = vmatprep.subr.mxu0 0.0
        %1022 = vmatpush1.msra.mxu0 0.0
        %1023 = vmatprep.subr.mxu0 0.0
        %1024 = vmatpush1.msra.mxu0 0.0
        %1025 = vmatprep.subr.mxu0 0.0
        %1026 = vmatpush1.msra.mxu0 0.0
        %1027 = vmatprep.subr.mxu0 0.0
        %1028 = vmatpush1.msra.mxu0 0.0
        %1029 = vmatprep.mubr.f32.mxu0 0.0
        %1030 = vmatmul.mubr.f32.gmra.mrb[0].mxu0 %v892
        %v1031 = vpop.f32.mrb[0].mxu0
        %v1032 = vadd.f32 %v888, %v1031
        %v1033 = vpop.f32.mrb[0].mxu0
        %v1034 = vadd.f32 %v888, %v1033
        %1035 = vdwg.mxu0
        %v1036 = vadd.f32 %v961, %v514
        %v1037 = vadd.f32 %v963, %v515
        %v1038 = vadd.f32 %v1032, %v516
        %v1039 = vadd.f32 %v1034, %v517
        %v1040 = vsel %vm469, %v1036, 0.0
        %v1041 = vsel %vm470, %v1037, 0.0
        %v1042 = vsel %vm471, %v1038, 0.0
        %v1043 = vsel %vm472, %v1039, 0.0
        %1044 = vrot.lane.b32.xlu0 %v1040, 4
        %v1045 = vpop.permute.xlu0 %1044
        %1046 = vrot.lane.b32.xlu0 %v1041, 4
        %v1047 = vpop.permute.xlu0 %1046
        %1048 = vrot.lane.b32.xlu0 %v1042, 4
        %v1049 = vpop.permute.xlu0 %1048
        %1050 = vrot.lane.b32.xlu0 %v1043, 4
        %v1051 = vpop.permute.xlu0 %1050
        %vm1052 = vcmp.lt.s32.totalorder %v414, 4
        %v1053 = vsel %vm1052, %v1049, %v1051
        %v1054 = vsel %vm1052, %v1047, %v1049
        %v1055 = vsel %vm1052, %v1045, %v1047
        %v1056 = vsel %vm1052, %v1051, %v1045
        %1057 = vrot.lane.b32.xlu0 %v1040, 2
        %v1058 = vpop.permute.xlu0 %1057
        %1059 = vrot.lane.b32.xlu0 %v1041, 2
        %v1060 = vpop.permute.xlu0 %1059
        %1061 = vrot.lane.b32.xlu0 %v1042, 2
        %v1062 = vpop.permute.xlu0 %1061
        %1063 = vrot.lane.b32.xlu0 %v1043, 2
        %v1064 = vpop.permute.xlu0 %1063
        %v1065 = vsel %vm526, %v1062, %v1064
        %v1066 = vsel %vm526, %v1060, %v1062
        %v1067 = vsel %vm526, %v1058, %v1060
        %v1068 = vsel %vm526, %v1064, %v1058
        %s1069 = scalar_lea.vmem %s3, 8
        %v1070 = vld [vmem:[%s1069] sm:$0xff]
        %s1071 = scalar_lea.vmem %s4, 8
        %v1072 = vld [vmem:[%s1071] sm:$0xff]
        %1074 = vset.pattern.permute.xlu0 0
        %1075 = vperm.xlu0 %1074, %v1072
        %v1076 = vpop.permute.xlu0 %1075
        %v1079 = vsel %vm551, %v1070, 0
        %1081 = vmatprep.subr.mxu0 %v1055
        %1082 = vmatpush1.msra.mxu0 %v1056
        %1083 = vmatprep.subr.mxu0 %v1067
        %1084 = vmatpush1.msra.mxu0 %v1068
        %1085 = vmatprep.subr.mxu0 %v1041
        %1086 = vmatpush1.msra.mxu0 %v1040
        %1087 = vmatprep.subr.mxu0 0.0
        %1088 = vmatpush1.msra.mxu0 0.0
        %1089 = vmatprep.subr.mxu0 0.0
        %1090 = vmatpush1.msra.mxu0 0.0
        %1091 = vmatprep.subr.mxu0 0.0
        %1092 = vmatpush1.msra.mxu0 0.0
        %1093 = vmatprep.subr.mxu0 0.0
        %1094 = vmatpush1.msra.mxu0 0.0
        %1095 = vmatprep.subr.mxu0 0.0
        %1096 = vmatpush1.msra.mxu0 0.0
        %1097 = vmatprep.subr.mxu0 0.0
        %1098 = vmatpush1.msra.mxu0 0.0
        %1099 = vmatprep.subr.mxu0 0.0
        %1100 = vmatpush1.msra.mxu0 0.0
        %1101 = vmatprep.subr.mxu0 0.0
        %1102 = vmatpush1.msra.mxu0 0.0
        %1103 = vmatprep.subr.mxu0 0.0
        %1104 = vmatpush1.msra.mxu0 0.0
        %1105 = vmatprep.subr.mxu0 0.0
        %1106 = vmatpush1.msra.mxu0 0.0
        %1107 = vmatprep.subr.mxu0 0.0
        %1108 = vmatpush1.msra.mxu0 0.0
        %1109 = vmatprep.subr.mxu0 0.0
        %1110 = vmatpush1.msra.mxu0 0.0
        %1111 = vmatprep.subr.mxu0 0.0
        %1112 = vmatpush1.msra.mxu0 0.0
        %1113 = vmatprep.subr.mxu0 0.0
        %1114 = vmatpush1.msra.mxu0 0.0
        %1115 = vmatprep.subr.mxu0 0.0
        %1116 = vmatpush1.msra.mxu0 0.0
        %1117 = vmatprep.subr.mxu0 0.0
        %1118 = vmatpush1.msra.mxu0 0.0
        %1119 = vmatprep.subr.mxu0 0.0
        %1120 = vmatpush1.msra.mxu0 0.0
        %1121 = vmatprep.subr.mxu0 0.0
        %1122 = vmatpush1.msra.mxu0 0.0
        %1123 = vmatprep.subr.mxu0 0.0
        %1124 = vmatpush1.msra.mxu0 0.0
        %1125 = vmatprep.subr.mxu0 0.0
        %1126 = vmatpush1.msra.mxu0 0.0
        %1127 = vmatprep.subr.mxu0 0.0
        %1128 = vmatpush1.msra.mxu0 0.0
        %1129 = vmatprep.subr.mxu0 0.0
        %1130 = vmatpush1.msra.mxu0 0.0
        %1131 = vmatprep.subr.mxu0 0.0
        %1132 = vmatpush1.msra.mxu0 0.0
        %1133 = vmatprep.subr.mxu0 0.0
        %1134 = vmatpush1.msra.mxu0 0.0
        %1135 = vmatprep.subr.mxu0 0.0
        %1136 = vmatpush1.msra.mxu0 0.0
        %1137 = vmatprep.subr.mxu0 0.0
        %1138 = vmatpush1.msra.mxu0 0.0
        %1139 = vmatprep.subr.mxu0 0.0
        %1140 = vmatpush1.msra.mxu0 0.0
        %1141 = vmatprep.subr.mxu0 0.0
        %1142 = vmatpush1.msra.mxu0 0.0
        %1143 = vmatprep.subr.mxu0 0.0
        %1144 = vmatpush1.msra.mxu0 0.0
        %1145 = vmatprep.mubr.f32.mxu0 0.0
        %1146 = vmatmul.mubr.f32.gmra.mrb[0].mxu0 %v1079
        %v1147 = vpop.f32.mrb[0].mxu0
        %v1148 = vadd.f32 %v1076, %v1147
        %v1149 = vpop.f32.mrb[0].mxu0
        %v1150 = vadd.f32 %v1076, %v1149
        %1151 = vdwg.mxu0
        %1152 = vmatprep.subr.mxu0 %v1053
        %1153 = vmatpush1.msra.mxu0 %v1054
        %1154 = vmatprep.subr.mxu0 %v1065
        %1155 = vmatpush1.msra.mxu0 %v1066
        %1156 = vmatprep.subr.mxu0 %v1043
        %1157 = vmatpush1.msra.mxu0 %v1042
        %1158 = vmatprep.subr.mxu0 0.0
        %1159 = vmatpush1.msra.mxu0 0.0
        %1160 = vmatprep.subr.mxu0 0.0
        %1161 = vmatpush1.msra.mxu0 0.0
        %1162 = vmatprep.subr.mxu0 0.0
        %1163 = vmatpush1.msra.mxu0 0.0
        %1164 = vmatprep.subr.mxu0 0.0
        %1165 = vmatpush1.msra.mxu0 0.0
        %1166 = vmatprep.subr.mxu0 0.0
        %1167 = vmatpush1.msra.mxu0 0.0
        %1168 = vmatprep.subr.mxu0 0.0
        %1169 = vmatpush1.msra.mxu0 0.0
        %1170 = vmatprep.subr.mxu0 0.0
        %1171 = vmatpush1.msra.mxu0 0.0
        %1172 = vmatprep.subr.mxu0 0.0
        %1173 = vmatpush1.msra.mxu0 0.0
        %1174 = vmatprep.subr.mxu0 0.0
        %1175 = vmatpush1.msra.mxu0 0.0
        %1176 = vmatprep.subr.mxu0 0.0
        %1177 = vmatpush1.msra.mxu0 0.0
        %1178 = vmatprep.subr.mxu0 0.0
        %1179 = vmatpush1.msra.mxu0 0.0
        %1180 = vmatprep.subr.mxu0 0.0
        %1181 = vmatpush1.msra.mxu0 0.0
        %1182 = vmatprep.subr.mxu0 0.0
        %1183 = vmatpush1.msra.mxu0 0.0
        %1184 = vmatprep.subr.mxu0 0.0
        %1185 = vmatpush1.msra.mxu0 0.0
        %1186 = vmatprep.subr.mxu0 0.0
        %1187 = vmatpush1.msra.mxu0 0.0
        %1188 = vmatprep.subr.mxu0 0.0
        %1189 = vmatpush1.msra.mxu0 0.0
        %1190 = vmatprep.subr.mxu0 0.0
        %1191 = vmatpush1.msra.mxu0 0.0
        %1192 = vmatprep.subr.mxu0 0.0
        %1193 = vmatpush1.msra.mxu0 0.0
        %1194 = vmatprep.subr.mxu0 0.0
        %1195 = vmatpush1.msra.mxu0 0.0
        %1196 = vmatprep.subr.mxu0 0.0
        %1197 = vmatpush1.msra.mxu0 0.0
        %1198 = vmatprep.subr.mxu0 0.0
        %1199 = vmatpush1.msra.mxu0 0.0
        %1200 = vmatprep.subr.mxu0 0.0
        %1201 = vmatpush1.msra.mxu0 0.0
        %1202 = vmatprep.subr.mxu0 0.0
        %1203 = vmatpush1.msra.mxu0 0.0
        %1204 = vmatprep.subr.mxu0 0.0
        %1205 = vmatpush1.msra.mxu0 0.0
        %1206 = vmatprep.subr.mxu0 0.0
        %1207 = vmatpush1.msra.mxu0 0.0
        %1208 = vmatprep.subr.mxu0 0.0
        %1209 = vmatpush1.msra.mxu0 0.0
        %1210 = vmatprep.subr.mxu0 0.0
        %1211 = vmatpush1.msra.mxu0 0.0
        %1212 = vmatprep.subr.mxu0 0.0
        %1213 = vmatpush1.msra.mxu0 0.0
        %1214 = vmatprep.subr.mxu0 0.0
        %1215 = vmatpush1.msra.mxu0 0.0
        %1216 = vmatprep.mubr.f32.mxu0 0.0
        %1217 = vmatmul.mubr.f32.gmra.mrb[0].mxu0 %v1079
        %v1218 = vpop.f32.mrb[0].mxu0
        %v1219 = vadd.f32 %v1076, %v1218
        %v1220 = vpop.f32.mrb[0].mxu0
        %v1221 = vadd.f32 %v1076, %v1220
        %1222 = vdwg.mxu0
        %s1223 = scalar_lea.vmem %s5, 8
        %v1224 = vld [vmem:[%s1223] sm:$0xff]
        %s1225 = scalar_lea.vmem %s6, 8
        %v1226 = vld [vmem:[%s1225] sm:$0xff]
        %1228 = vset.pattern.permute.xlu0 0
        %1229 = vperm.xlu0 %1228, %v1226
        %v1230 = vpop.permute.xlu0 %1229
        %v1233 = vsel %vm551, %v1224, 0
        %1235 = vmatprep.subr.mxu0 %v1055
        %1236 = vmatpush1.msra.mxu0 %v1056
        %1237 = vmatprep.subr.mxu0 %v1067
        %1238 = vmatpush1.msra.mxu0 %v1068
        %1239 = vmatprep.subr.mxu0 %v1041
        %1240 = vmatpush1.msra.mxu0 %v1040
        %1241 = vmatprep.subr.mxu0 0.0
        %1242 = vmatpush1.msra.mxu0 0.0
        %1243 = vmatprep.subr.mxu0 0.0
        %1244 = vmatpush1.msra.mxu0 0.0
        %1245 = vmatprep.subr.mxu0 0.0
        %1246 = vmatpush1.msra.mxu0 0.0
        %1247 = vmatprep.subr.mxu0 0.0
        %1248 = vmatpush1.msra.mxu0 0.0
        %1249 = vmatprep.subr.mxu0 0.0
        %1250 = vmatpush1.msra.mxu0 0.0
        %1251 = vmatprep.subr.mxu0 0.0
        %1252 = vmatpush1.msra.mxu0 0.0
        %1253 = vmatprep.subr.mxu0 0.0
        %1254 = vmatpush1.msra.mxu0 0.0
        %1255 = vmatprep.subr.mxu0 0.0
        %1256 = vmatpush1.msra.mxu0 0.0
        %1257 = vmatprep.subr.mxu0 0.0
        %1258 = vmatpush1.msra.mxu0 0.0
        %1259 = vmatprep.subr.mxu0 0.0
        %1260 = vmatpush1.msra.mxu0 0.0
        %1261 = vmatprep.subr.mxu0 0.0
        %1262 = vmatpush1.msra.mxu0 0.0
        %1263 = vmatprep.subr.mxu0 0.0
        %1264 = vmatpush1.msra.mxu0 0.0
        %1265 = vmatprep.subr.mxu0 0.0
        %1266 = vmatpush1.msra.mxu0 0.0
        %1267 = vmatprep.subr.mxu0 0.0
        %1268 = vmatpush1.msra.mxu0 0.0
        %1269 = vmatprep.subr.mxu0 0.0
        %1270 = vmatpush1.msra.mxu0 0.0
        %1271 = vmatprep.subr.mxu0 0.0
        %1272 = vmatpush1.msra.mxu0 0.0
        %1273 = vmatprep.subr.mxu0 0.0
        %1274 = vmatpush1.msra.mxu0 0.0
        %1275 = vmatprep.subr.mxu0 0.0
        %1276 = vmatpush1.msra.mxu0 0.0
        %1277 = vmatprep.subr.mxu0 0.0
        %1278 = vmatpush1.msra.mxu0 0.0
        %1279 = vmatprep.subr.mxu0 0.0
        %1280 = vmatpush1.msra.mxu0 0.0
        %1281 = vmatprep.subr.mxu0 0.0
        %1282 = vmatpush1.msra.mxu0 0.0
        %1283 = vmatprep.subr.mxu0 0.0
        %1284 = vmatpush1.msra.mxu0 0.0
        %1285 = vmatprep.subr.mxu0 0.0
        %1286 = vmatpush1.msra.mxu0 0.0
        %1287 = vmatprep.subr.mxu0 0.0
        %1288 = vmatpush1.msra.mxu0 0.0
        %1289 = vmatprep.subr.mxu0 0.0
        %1290 = vmatpush1.msra.mxu0 0.0
        %1291 = vmatprep.subr.mxu0 0.0
        %1292 = vmatpush1.msra.mxu0 0.0
        %1293 = vmatprep.subr.mxu0 0.0
        %1294 = vmatpush1.msra.mxu0 0.0
        %1295 = vmatprep.subr.mxu0 0.0
        %1296 = vmatpush1.msra.mxu0 0.0
        %1297 = vmatprep.subr.mxu0 0.0
        %1298 = vmatpush1.msra.mxu0 0.0
        %1299 = vmatprep.mubr.f32.mxu0 0.0
        %1300 = vmatmul.mubr.f32.gmra.mrb[0].mxu0 %v1233
        %v1301 = vpop.f32.mrb[0].mxu0
        %v1302 = vadd.f32 %v1230, %v1301
        %v1303 = vpop.f32.mrb[0].mxu0
        %v1304 = vadd.f32 %v1230, %v1303
        %1305 = vdwg.mxu0
        %1306 = vmatprep.subr.mxu0 %v1053
        %1307 = vmatpush1.msra.mxu0 %v1054
        %1308 = vmatprep.subr.mxu0 %v1065
        %1309 = vmatpush1.msra.mxu0 %v1066
        %1310 = vmatprep.subr.mxu0 %v1043
        %1311 = vmatpush1.msra.mxu0 %v1042
        %1312 = vmatprep.subr.mxu0 0.0
        %1313 = vmatpush1.msra.mxu0 0.0
        %1314 = vmatprep.subr.mxu0 0.0
        %1315 = vmatpush1.msra.mxu0 0.0
        %1316 = vmatprep.subr.mxu0 0.0
        %1317 = vmatpush1.msra.mxu0 0.0
        %1318 = vmatprep.subr.mxu0 0.0
        %1319 = vmatpush1.msra.mxu0 0.0
        %1320 = vmatprep.subr.mxu0 0.0
        %1321 = vmatpush1.msra.mxu0 0.0
        %1322 = vmatprep.subr.mxu0 0.0
        %1323 = vmatpush1.msra.mxu0 0.0
        %1324 = vmatprep.subr.mxu0 0.0
        %1325 = vmatpush1.msra.mxu0 0.0
        %1326 = vmatprep.subr.mxu0 0.0
        %1327 = vmatpush1.msra.mxu0 0.0
        %1328 = vmatprep.subr.mxu0 0.0
        %1329 = vmatpush1.msra.mxu0 0.0
        %1330 = vmatprep.subr.mxu0 0.0
        %1331 = vmatpush1.msra.mxu0 0.0
        %1332 = vmatprep.subr.mxu0 0.0
        %1333 = vmatpush1.msra.mxu0 0.0
        %1334 = vmatprep.subr.mxu0 0.0
        %1335 = vmatpush1.msra.mxu0 0.0
        %1336 = vmatprep.subr.mxu0 0.0
        %1337 = vmatpush1.msra.mxu0 0.0
        %1338 = vmatprep.subr.mxu0 0.0
        %1339 = vmatpush1.msra.mxu0 0.0
        %1340 = vmatprep.subr.mxu0 0.0
        %1341 = vmatpush1.msra.mxu0 0.0
        %1342 = vmatprep.subr.mxu0 0.0
        %1343 = vmatpush1.msra.mxu0 0.0
        %1344 = vmatprep.subr.mxu0 0.0
        %1345 = vmatpush1.msra.mxu0 0.0
        %1346 = vmatprep.subr.mxu0 0.0
        %1347 = vmatpush1.msra.mxu0 0.0
        %1348 = vmatprep.subr.mxu0 0.0
        %1349 = vmatpush1.msra.mxu0 0.0
        %1350 = vmatprep.subr.mxu0 0.0
        %1351 = vmatpush1.msra.mxu0 0.0
        %1352 = vmatprep.subr.mxu0 0.0
        %1353 = vmatpush1.msra.mxu0 0.0
        %1354 = vmatprep.subr.mxu0 0.0
        %1355 = vmatpush1.msra.mxu0 0.0
        %1356 = vmatprep.subr.mxu0 0.0
        %1357 = vmatpush1.msra.mxu0 0.0
        %1358 = vmatprep.subr.mxu0 0.0
        %1359 = vmatpush1.msra.mxu0 0.0
        %1360 = vmatprep.subr.mxu0 0.0
        %1361 = vmatpush1.msra.mxu0 0.0
        %1362 = vmatprep.subr.mxu0 0.0
        %1363 = vmatpush1.msra.mxu0 0.0
        %1364 = vmatprep.subr.mxu0 0.0
        %1365 = vmatpush1.msra.mxu0 0.0
        %1366 = vmatprep.subr.mxu0 0.0
        %1367 = vmatpush1.msra.mxu0 0.0
        %1368 = vmatprep.subr.mxu0 0.0
        %1369 = vmatpush1.msra.mxu0 0.0
        %1370 = vmatprep.mubr.f32.mxu0 0.0
        %1371 = vmatmul.mubr.f32.gmra.mrb[0].mxu0 %v1233
        %v1372 = vpop.f32.mrb[0].mxu0
        %v1373 = vadd.f32 %v1230, %v1372
        %v1374 = vpop.f32.mrb[0].mxu0
        %v1375 = vadd.f32 %v1230, %v1374
        %1376 = vdwg.mxu0
        %v1377 = vtanh.pop %v1148
        %v1378 = vtanh.pop %v1150
        %v1379 = vtanh.pop %v1219
        %v1380 = vtanh.pop %v1221
        %v1381 = vmul.f32 %v1302, 0.5
        %v1382 = vmul.f32 %v1304, 0.5
        %v1383 = vmul.f32 %v1373, 0.5
        %v1384 = vmul.f32 %v1375, 0.5
        %v1385 = vtanh.pop %v1381
        %v1386 = vtanh.pop %v1382
        %v1387 = vtanh.pop %v1383
        %v1388 = vtanh.pop %v1384
        %v1389 = vmul.f32 %v1385, 0.5
        %v1390 = vmul.f32 %v1386, 0.5
        %v1391 = vmul.f32 %v1387, 0.5
        %v1392 = vmul.f32 %v1388, 0.5
        %v1393 = vadd.f32 %v1389, 0.5
        %v1394 = vadd.f32 %v1390, 0.5
        %v1395 = vadd.f32 %v1391, 0.5
        %v1396 = vadd.f32 %v1392, 0.5
        %v1397 = vmul.f32 %v1377, %v1393
        %v1398 = vmul.f32 %v1378, %v1394
        %v1399 = vmul.f32 %v1379, %v1395
        %v1400 = vmul.f32 %v1380, %v1396
        %s1401 = scalar_lea.vmem %s9, 8
        %v1402 = vld [vmem:[%s1401] sm:$0xff]
        %1404 = vset.pattern.permute.xlu0 0
        %1405 = vperm.xlu0 %1404, %v1402
        %v1406 = vpop.permute.xlu0 %1405
        %v1408 = vmul.f32 %v1406, %v1398
        %v1409 = vmul.f32 %v1406, %v1400
        %v1410 = vadd.f32 %v881, %v1408
        %v1411 = vadd.f32 %v882, %v1409
        %s1412 = scalar_lea.vmem %s7, 8
        %v1413 = vld [vmem:[%s1412] sm:$0xff]
        %s1414 = scalar_lea.vmem %s8, 8
        %v1415 = vld [vmem:[%s1414] sm:$0xff]
        %1417 = vset.pattern.permute.xlu0 0
        %1418 = vperm.xlu0 %1417, %v1415
        %v1419 = vpop.permute.xlu0 %1418
        %v1422 = vsel %vm890, %v1413, 0
        %1424 = vmatprep.subr.mxu0 %v1398
        %1425 = vmatpush1.msra.mxu0 %v1397
        %1426 = vmatprep.subr.mxu0 0.0
        %1427 = vmatpush1.msra.mxu0 0.0
        %1428 = vmatprep.subr.mxu0 0.0
        %1429 = vmatpush1.msra.mxu0 0.0
        %1430 = vmatprep.subr.mxu0 0.0
        %1431 = vmatpush1.msra.mxu0 0.0
        %1432 = vmatprep.subr.mxu0 0.0
        %1433 = vmatpush1.msra.mxu0 0.0
        %1434 = vmatprep.subr.mxu0 0.0
        %1435 = vmatpush1.msra.mxu0 0.0
        %1436 = vmatprep.subr.mxu0 0.0
        %1437 = vmatpush1.msra.mxu0 0.0
        %1438 = vmatprep.subr.mxu0 0.0
        %1439 = vmatpush1.msra.mxu0 0.0
        %1440 = vmatprep.subr.mxu0 0.0
        %1441 = vmatpush1.msra.mxu0 0.0
        %1442 = vmatprep.subr.mxu0 0.0
        %1443 = vmatpush1.msra.mxu0 0.0
        %1444 = vmatprep.subr.mxu0 0.0
        %1445 = vmatpush1.msra.mxu0 0.0
        %1446 = vmatprep.subr.mxu0 0.0
        %1447 = vmatpush1.msra.mxu0 0.0
        %1448 = vmatprep.subr.mxu0 0.0
        %1449 = vmatpush1.msra.mxu0 0.0
        %1450 = vmatprep.subr.mxu0 0.0
        %1451 = vmatpush1.msra.mxu0 0.0
        %1452 = vmatprep.subr.mxu0 0.0
        %1453 = vmatpush1.msra.mxu0 0.0
        %1454 = vmatprep.subr.mxu0 0.0
        %1455 = vmatpush1.msra.mxu0 0.0
        %1456 = vmatprep.subr.mxu0 0.0
        %1457 = vmatpush1.msra.mxu0 0.0
        %1458 = vmatprep.subr.mxu0 0.0
        %1459 = vmatpush1.msra.mxu0 0.0
        %1460 = vmatprep.subr.mxu0 0.0
        %1461 = vmatpush1.msra.mxu0 0.0
        %1462 = vmatprep.subr.mxu0 0.0
        %1463 = vmatpush1.msra.mxu0 0.0
        %1464 = vmatprep.subr.mxu0 0.0
        %1465 = vmatpush1.msra.mxu0 0.0
        %1466 = vmatprep.subr.mxu0 0.0
        %1467 = vmatpush1.msra.mxu0 0.0
        %1468 = vmatprep.subr.mxu0 0.0
        %1469 = vmatpush1.msra.mxu0 0.0
        %1470 = vmatprep.subr.mxu0 0.0
        %1471 = vmatpush1.msra.mxu0 0.0
        %1472 = vmatprep.subr.mxu0 0.0
        %1473 = vmatpush1.msra.mxu0 0.0
        %1474 = vmatprep.subr.mxu0 0.0
        %1475 = vmatpush1.msra.mxu0 0.0
        %1476 = vmatprep.subr.mxu0 0.0
        %1477 = vmatpush1.msra.mxu0 0.0
        %1478 = vmatprep.subr.mxu0 0.0
        %1479 = vmatpush1.msra.mxu0 0.0
        %1480 = vmatprep.subr.mxu0 0.0
        %1481 = vmatpush1.msra.mxu0 0.0
        %1482 = vmatprep.subr.mxu0 0.0
        %1483 = vmatpush1.msra.mxu0 0.0
        %1484 = vmatprep.subr.mxu0 0.0
        %1485 = vmatpush1.msra.mxu0 0.0
        %1486 = vmatprep.subr.mxu0 0.0
        %1487 = vmatpush1.msra.mxu0 0.0
        %1488 = vmatprep.mubr.f32.mxu0 0.0
        %1489 = vmatmul.mubr.f32.gmra.mrb[0].mxu0 %v1422
        %v1490 = vpop.f32.mrb[0].mxu0
        %v1491 = vadd.f32 %v1419, %v1490
        %v1492 = vpop.f32.mrb[0].mxu0
        %v1493 = vadd.f32 %v1419, %v1492
        %1494 = vdwg.mxu0
        %1495 = vmatprep.subr.mxu0 %v1400
        %1496 = vmatpush1.msra.mxu0 %v1399
        %1497 = vmatprep.subr.mxu0 0.0
        %1498 = vmatpush1.msra.mxu0 0.0
        %1499 = vmatprep.subr.mxu0 0.0
        %1500 = vmatpush1.msra.mxu0 0.0
        %1501 = vmatprep.subr.mxu0 0.0
        %1502 = vmatpush1.msra.mxu0 0.0
        %1503 = vmatprep.subr.mxu0 0.0
        %1504 = vmatpush1.msra.mxu0 0.0
        %1505 = vmatprep.subr.mxu0 0.0
        %1506 = vmatpush1.msra.mxu0 0.0
        %1507 = vmatprep.subr.mxu0 0.0
        %1508 = vmatpush1.msra.mxu0 0.0
        %1509 = vmatprep.subr.mxu0 0.0
        %1510 = vmatpush1.msra.mxu0 0.0
        %1511 = vmatprep.subr.mxu0 0.0
        %1512 = vmatpush1.msra.mxu0 0.0
        %1513 = vmatprep.subr.mxu0 0.0
        %1514 = vmatpush1.msra.mxu0 0.0
        %1515 = vmatprep.subr.mxu0 0.0
        %1516 = vmatpush1.msra.mxu0 0.0
        %1517 = vmatprep.subr.mxu0 0.0
        %1518 = vmatpush1.msra.mxu0 0.0
        %1519 = vmatprep.subr.mxu0 0.0
        %1520 = vmatpush1.msra.mxu0 0.0
        %1521 = vmatprep.subr.mxu0 0.0
        %1522 = vmatpush1.msra.mxu0 0.0
        %1523 = vmatprep.subr.mxu0 0.0
        %1524 = vmatpush1.msra.mxu0 0.0
        %1525 = vmatprep.subr.mxu0 0.0
        %1526 = vmatpush1.msra.mxu0 0.0
        %1527 = vmatprep.subr.mxu0 0.0
        %1528 = vmatpush1.msra.mxu0 0.0
        %1529 = vmatprep.subr.mxu0 0.0
        %1530 = vmatpush1.msra.mxu0 0.0
        %1531 = vmatprep.subr.mxu0 0.0
        %1532 = vmatpush1.msra.mxu0 0.0
        %1533 = vmatprep.subr.mxu0 0.0
        %1534 = vmatpush1.msra.mxu0 0.0
        %1535 = vmatprep.subr.mxu0 0.0
        %1536 = vmatpush1.msra.mxu0 0.0
        %1537 = vmatprep.subr.mxu0 0.0
        %1538 = vmatpush1.msra.mxu0 0.0
        %1539 = vmatprep.subr.mxu0 0.0
        %1540 = vmatpush1.msra.mxu0 0.0
        %1541 = vmatprep.subr.mxu0 0.0
        %1542 = vmatpush1.msra.mxu0 0.0
        %1543 = vmatprep.subr.mxu0 0.0
        %1544 = vmatpush1.msra.mxu0 0.0
        %1545 = vmatprep.subr.mxu0 0.0
        %1546 = vmatpush1.msra.mxu0 0.0
        %1547 = vmatprep.subr.mxu0 0.0
        %1548 = vmatpush1.msra.mxu0 0.0
        %1549 = vmatprep.subr.mxu0 0.0
        %1550 = vmatpush1.msra.mxu0 0.0
        %1551 = vmatprep.subr.mxu0 0.0
        %1552 = vmatpush1.msra.mxu0 0.0
        %1553 = vmatprep.subr.mxu0 0.0
        %1554 = vmatpush1.msra.mxu0 0.0
        %1555 = vmatprep.subr.mxu0 0.0
        %1556 = vmatpush1.msra.mxu0 0.0
        %1557 = vmatprep.subr.mxu0 0.0
        %1558 = vmatpush1.msra.mxu0 0.0
        %1559 = vmatprep.mubr.f32.mxu0 0.0
        %1560 = vmatmul.mubr.f32.gmra.mrb[0].mxu0 %v1422
        %v1561 = vpop.f32.mrb[0].mxu0
        %v1562 = vadd.f32 %v1419, %v1561
        %v1563 = vpop.f32.mrb[0].mxu0
        %v1564 = vadd.f32 %v1419, %v1563
        %1565 = vdwg.mxu0
        %v1566 = vadd.f32 %v1491, %v1040
        %v1567 = vadd.f32 %v1493, %v1041
        %v1568 = vadd.f32 %v1562, %v1042
        %v1569 = vadd.f32 %v1564, %v1043
        %v1570 = vsel %vm469, %v1566, 0.0
        %v1571 = vsel %vm470, %v1567, 0.0
        %v1572 = vsel %vm471, %v1568, 0.0
        %v1573 = vsel %vm472, %v1569, 0.0
        %1574 = vrot.lane.b32.xlu0 %v1570, 2
        %v1575 = vpop.permute.xlu0 %1574
        %1576 = vrot.lane.b32.xlu0 %v1571, 2
        %v1577 = vpop.permute.xlu0 %1576
        %1578 = vrot.lane.b32.xlu0 %v1572, 2
        %v1579 = vpop.permute.xlu0 %1578
        %1580 = vrot.lane.b32.xlu0 %v1573, 2
        %v1581 = vpop.permute.xlu0 %1580
        %v1582 = vsel %vm526, %v1579, %v1581
        %v1583 = vsel %vm526, %v1577, %v1579
        %v1584 = vsel %vm526, %v1575, %v1577
        %v1585 = vsel %vm526, %v1581, %v1575
        %1586 = vrot.lane.b32.xlu0 %v1570, 1
        %v1587 = vpop.permute.xlu0 %1586
        %1588 = vrot.lane.b32.xlu0 %v1571, 1
        %v1589 = vpop.permute.xlu0 %1588
        %1590 = vrot.lane.b32.xlu0 %v1572, 1
        %v1591 = vpop.permute.xlu0 %1590
        %1592 = vrot.lane.b32.xlu0 %v1573, 1
        %v1593 = vpop.permute.xlu0 %1592
        %v1594 = vsel %vm539, %v1591, %v1593
        %v1595 = vsel %vm539, %v1589, %v1591
        %v1596 = vsel %vm539, %v1587, %v1589
        %v1597 = vsel %vm539, %v1593, %v1587
        %s1598 = scalar_lea.vmem %s3, 16
        %v1599 = vld [vmem:[%s1598] sm:$0xff]
        %s1600 = scalar_lea.vmem %s4, 16
        %v1601 = vld [vmem:[%s1600] sm:$0xff]
        %1603 = vset.pattern.permute.xlu0 0
        %1604 = vperm.xlu0 %1603, %v1601
        %v1605 = vpop.permute.xlu0 %1604
        %v1608 = vsel %vm551, %v1599, 0
        %1610 = vmatprep.subr.mxu0 %v1584
        %1611 = vmatpush1.msra.mxu0 %v1585
        %1612 = vmatprep.subr.mxu0 %v1596
        %1613 = vmatpush1.msra.mxu0 %v1597
        %1614 = vmatprep.subr.mxu0 %v1571
        %1615 = vmatpush1.msra.mxu0 %v1570
        %1616 = vmatprep.subr.mxu0 0.0
        %1617 = vmatpush1.msra.mxu0 0.0
        %1618 = vmatprep.subr.mxu0 0.0
        %1619 = vmatpush1.msra.mxu0 0.0
        %1620 = vmatprep.subr.mxu0 0.0
        %1621 = vmatpush1.msra.mxu0 0.0
        %1622 = vmatprep.subr.mxu0 0.0
        %1623 = vmatpush1.msra.mxu0 0.0
        %1624 = vmatprep.subr.mxu0 0.0
        %1625 = vmatpush1.msra.mxu0 0.0
        %1626 = vmatprep.subr.mxu0 0.0
        %1627 = vmatpush1.msra.mxu0 0.0
        %1628 = vmatprep.subr.mxu0 0.0
        %1629 = vmatpush1.msra.mxu0 0.0
        %1630 = vmatprep.subr.mxu0 0.0
        %1631 = vmatpush1.msra.mxu0 0.0
        %1632 = vmatprep.subr.mxu0 0.0
        %1633 = vmatpush1.msra.mxu0 0.0
        %1634 = vmatprep.subr.mxu0 0.0
        %1635 = vmatpush1.msra.mxu0 0.0
        %1636 = vmatprep.subr.mxu0 0.0
        %1637 = vmatpush1.msra.mxu0 0.0
        %1638 = vmatprep.subr.mxu0 0.0
        %1639 = vmatpush1.msra.mxu0 0.0
        %1640 = vmatprep.subr.mxu0 0.0
        %1641 = vmatpush1.msra.mxu0 0.0
        %1642 = vmatprep.subr.mxu0 0.0
        %1643 = vmatpush1.msra.mxu0 0.0
        %1644 = vmatprep.subr.mxu0 0.0
        %1645 = vmatpush1.msra.mxu0 0.0
        %1646 = vmatprep.subr.mxu0 0.0
        %1647 = vmatpush1.msra.mxu0 0.0
        %1648 = vmatprep.subr.mxu0 0.0
        %1649 = vmatpush1.msra.mxu0 0.0
        %1650 = vmatprep.subr.mxu0 0.0
        %1651 = vmatpush1.msra.mxu0 0.0
        %1652 = vmatprep.subr.mxu0 0.0
        %1653 = vmatpush1.msra.mxu0 0.0
        %1654 = vmatprep.subr.mxu0 0.0
        %1655 = vmatpush1.msra.mxu0 0.0
        %1656 = vmatprep.subr.mxu0 0.0
        %1657 = vmatpush1.msra.mxu0 0.0
        %1658 = vmatprep.subr.mxu0 0.0
        %1659 = vmatpush1.msra.mxu0 0.0
        %1660 = vmatprep.subr.mxu0 0.0
        %1661 = vmatpush1.msra.mxu0 0.0
        %1662 = vmatprep.subr.mxu0 0.0
        %1663 = vmatpush1.msra.mxu0 0.0
        %1664 = vmatprep.subr.mxu0 0.0
        %1665 = vmatpush1.msra.mxu0 0.0
        %1666 = vmatprep.subr.mxu0 0.0
        %1667 = vmatpush1.msra.mxu0 0.0
        %1668 = vmatprep.subr.mxu0 0.0
        %1669 = vmatpush1.msra.mxu0 0.0
        %1670 = vmatprep.subr.mxu0 0.0
        %1671 = vmatpush1.msra.mxu0 0.0
        %1672 = vmatprep.subr.mxu0 0.0
        %1673 = vmatpush1.msra.mxu0 0.0
        %1674 = vmatprep.mubr.f32.mxu0 0.0
        %1675 = vmatmul.mubr.f32.gmra.mrb[0].mxu0 %v1608
        %v1676 = vpop.f32.mrb[0].mxu0
        %v1677 = vadd.f32 %v1605, %v1676
        %v1678 = vpop.f32.mrb[0].mxu0
        %v1679 = vadd.f32 %v1605, %v1678
        %1680 = vdwg.mxu0
        %1681 = vmatprep.subr.mxu0 %v1582
        %1682 = vmatpush1.msra.mxu0 %v1583
        %1683 = vmatprep.subr.mxu0 %v1594
        %1684 = vmatpush1.msra.mxu0 %v1595
        %1685 = vmatprep.subr.mxu0 %v1573
        %1686 = vmatpush1.msra.mxu0 %v1572
        %1687 = vmatprep.subr.mxu0 0.0
        %1688 = vmatpush1.msra.mxu0 0.0
        %1689 = vmatprep.subr.mxu0 0.0
        %1690 = vmatpush1.msra.mxu0 0.0
        %1691 = vmatprep.subr.mxu0 0.0
        %1692 = vmatpush1.msra.mxu0 0.0
        %1693 = vmatprep.subr.mxu0 0.0
        %1694 = vmatpush1.msra.mxu0 0.0
        %1695 = vmatprep.subr.mxu0 0.0
        %1696 = vmatpush1.msra.mxu0 0.0
        %1697 = vmatprep.subr.mxu0 0.0
        %1698 = vmatpush1.msra.mxu0 0.0
        %1699 = vmatprep.subr.mxu0 0.0
        %1700 = vmatpush1.msra.mxu0 0.0
        %1701 = vmatprep.subr.mxu0 0.0
        %1702 = vmatpush1.msra.mxu0 0.0
        %1703 = vmatprep.subr.mxu0 0.0
        %1704 = vmatpush1.msra.mxu0 0.0
        %1705 = vmatprep.subr.mxu0 0.0
        %1706 = vmatpush1.msra.mxu0 0.0
        %1707 = vmatprep.subr.mxu0 0.0
        %1708 = vmatpush1.msra.mxu0 0.0
        %1709 = vmatprep.subr.mxu0 0.0
        %1710 = vmatpush1.msra.mxu0 0.0
        %1711 = vmatprep.subr.mxu0 0.0
        %1712 = vmatpush1.msra.mxu0 0.0
        %1713 = vmatprep.subr.mxu0 0.0
        %1714 = vmatpush1.msra.mxu0 0.0
        %1715 = vmatprep.subr.mxu0 0.0
        %1716 = vmatpush1.msra.mxu0 0.0
        %1717 = vmatprep.subr.mxu0 0.0
        %1718 = vmatpush1.msra.mxu0 0.0
        %1719 = vmatprep.subr.mxu0 0.0
        %1720 = vmatpush1.msra.mxu0 0.0
        %1721 = vmatprep.subr.mxu0 0.0
        %1722 = vmatpush1.msra.mxu0 0.0
        %1723 = vmatprep.subr.mxu0 0.0
        %1724 = vmatpush1.msra.mxu0 0.0
        %1725 = vmatprep.subr.mxu0 0.0
        %1726 = vmatpush1.msra.mxu0 0.0
        %1727 = vmatprep.subr.mxu0 0.0
        %1728 = vmatpush1.msra.mxu0 0.0
        %1729 = vmatprep.subr.mxu0 0.0
        %1730 = vmatpush1.msra.mxu0 0.0
        %1731 = vmatprep.subr.mxu0 0.0
        %1732 = vmatpush1.msra.mxu0 0.0
        %1733 = vmatprep.subr.mxu0 0.0
        %1734 = vmatpush1.msra.mxu0 0.0
        %1735 = vmatprep.subr.mxu0 0.0
        %1736 = vmatpush1.msra.mxu0 0.0
        %1737 = vmatprep.subr.mxu0 0.0
        %1738 = vmatpush1.msra.mxu0 0.0
        %1739 = vmatprep.subr.mxu0 0.0
        %1740 = vmatpush1.msra.mxu0 0.0
        %1741 = vmatprep.subr.mxu0 0.0
        %1742 = vmatpush1.msra.mxu0 0.0
        %1743 = vmatprep.subr.mxu0 0.0
        %1744 = vmatpush1.msra.mxu0 0.0
        %1745 = vmatprep.mubr.f32.mxu0 0.0
        %1746 = vmatmul.mubr.f32.gmra.mrb[0].mxu0 %v1608
        %v1747 = vpop.f32.mrb[0].mxu0
        %v1748 = vadd.f32 %v1605, %v1747
        %v1749 = vpop.f32.mrb[0].mxu0
        %v1750 = vadd.f32 %v1605, %v1749
        %1751 = vdwg.mxu0
        %s1752 = scalar_lea.vmem %s5, 16
        %v1753 = vld [vmem:[%s1752] sm:$0xff]
        %s1754 = scalar_lea.vmem %s6, 16
        %v1755 = vld [vmem:[%s1754] sm:$0xff]
        %1757 = vset.pattern.permute.xlu0 0
        %1758 = vperm.xlu0 %1757, %v1755
        %v1759 = vpop.permute.xlu0 %1758
        %v1762 = vsel %vm551, %v1753, 0
        %1764 = vmatprep.subr.mxu0 %v1584
        %1765 = vmatpush1.msra.mxu0 %v1585
        %1766 = vmatprep.subr.mxu0 %v1596
        %1767 = vmatpush1.msra.mxu0 %v1597
        %1768 = vmatprep.subr.mxu0 %v1571
        %1769 = vmatpush1.msra.mxu0 %v1570
        %1770 = vmatprep.subr.mxu0 0.0
        %1771 = vmatpush1.msra.mxu0 0.0
        %1772 = vmatprep.subr.mxu0 0.0
        %1773 = vmatpush1.msra.mxu0 0.0
        %1774 = vmatprep.subr.mxu0 0.0
        %1775 = vmatpush1.msra.mxu0 0.0
        %1776 = vmatprep.subr.mxu0 0.0
        %1777 = vmatpush1.msra.mxu0 0.0
        %1778 = vmatprep.subr.mxu0 0.0
        %1779 = vmatpush1.msra.mxu0 0.0
        %1780 = vmatprep.subr.mxu0 0.0
        %1781 = vmatpush1.msra.mxu0 0.0
        %1782 = vmatprep.subr.mxu0 0.0
        %1783 = vmatpush1.msra.mxu0 0.0
        %1784 = vmatprep.subr.mxu0 0.0
        %1785 = vmatpush1.msra.mxu0 0.0
        %1786 = vmatprep.subr.mxu0 0.0
        %1787 = vmatpush1.msra.mxu0 0.0
        %1788 = vmatprep.subr.mxu0 0.0
        %1789 = vmatpush1.msra.mxu0 0.0
        %1790 = vmatprep.subr.mxu0 0.0
        %1791 = vmatpush1.msra.mxu0 0.0
        %1792 = vmatprep.subr.mxu0 0.0
        %1793 = vmatpush1.msra.mxu0 0.0
        %1794 = vmatprep.subr.mxu0 0.0
        %1795 = vmatpush1.msra.mxu0 0.0
        %1796 = vmatprep.subr.mxu0 0.0
        %1797 = vmatpush1.msra.mxu0 0.0
        %1798 = vmatprep.subr.mxu0 0.0
        %1799 = vmatpush1.msra.mxu0 0.0
        %1800 = vmatprep.subr.mxu0 0.0
        %1801 = vmatpush1.msra.mxu0 0.0
        %1802 = vmatprep.subr.mxu0 0.0
        %1803 = vmatpush1.msra.mxu0 0.0
        %1804 = vmatprep.subr.mxu0 0.0
        %1805 = vmatpush1.msra.mxu0 0.0
        %1806 = vmatprep.subr.mxu0 0.0
        %1807 = vmatpush1.msra.mxu0 0.0
        %1808 = vmatprep.subr.mxu0 0.0
        %1809 = vmatpush1.msra.mxu0 0.0
        %1810 = vmatprep.subr.mxu0 0.0
        %1811 = vmatpush1.msra.mxu0 0.0
        %1812 = vmatprep.subr.mxu0 0.0
        %1813 = vmatpush1.msra.mxu0 0.0
        %1814 = vmatprep.subr.mxu0 0.0
        %1815 = vmatpush1.msra.mxu0 0.0
        %1816 = vmatprep.subr.mxu0 0.0
        %1817 = vmatpush1.msra.mxu0 0.0
        %1818 = vmatprep.subr.mxu0 0.0
        %1819 = vmatpush1.msra.mxu0 0.0
        %1820 = vmatprep.subr.mxu0 0.0
        %1821 = vmatpush1.msra.mxu0 0.0
        %1822 = vmatprep.subr.mxu0 0.0
        %1823 = vmatpush1.msra.mxu0 0.0
        %1824 = vmatprep.subr.mxu0 0.0
        %1825 = vmatpush1.msra.mxu0 0.0
        %1826 = vmatprep.subr.mxu0 0.0
        %1827 = vmatpush1.msra.mxu0 0.0
        %1828 = vmatprep.mubr.f32.mxu0 0.0
        %1829 = vmatmul.mubr.f32.gmra.mrb[0].mxu0 %v1762
        %v1830 = vpop.f32.mrb[0].mxu0
        %v1831 = vadd.f32 %v1759, %v1830
        %v1832 = vpop.f32.mrb[0].mxu0
        %v1833 = vadd.f32 %v1759, %v1832
        %1834 = vdwg.mxu0
        %1835 = vmatprep.subr.mxu0 %v1582
        %1836 = vmatpush1.msra.mxu0 %v1583
        %1837 = vmatprep.subr.mxu0 %v1594
        %1838 = vmatpush1.msra.mxu0 %v1595
        %1839 = vmatprep.subr.mxu0 %v1573
        %1840 = vmatpush1.msra.mxu0 %v1572
        %1841 = vmatprep.subr.mxu0 0.0
        %1842 = vmatpush1.msra.mxu0 0.0
        %1843 = vmatprep.subr.mxu0 0.0
        %1844 = vmatpush1.msra.mxu0 0.0
        %1845 = vmatprep.subr.mxu0 0.0
        %1846 = vmatpush1.msra.mxu0 0.0
        %1847 = vmatprep.subr.mxu0 0.0
        %1848 = vmatpush1.msra.mxu0 0.0
        %1849 = vmatprep.subr.mxu0 0.0
        %1850 = vmatpush1.msra.mxu0 0.0
        %1851 = vmatprep.subr.mxu0 0.0
        %1852 = vmatpush1.msra.mxu0 0.0
        %1853 = vmatprep.subr.mxu0 0.0
        %1854 = vmatpush1.msra.mxu0 0.0
        %1855 = vmatprep.subr.mxu0 0.0
        %1856 = vmatpush1.msra.mxu0 0.0
        %1857 = vmatprep.subr.mxu0 0.0
        %1858 = vmatpush1.msra.mxu0 0.0
        %1859 = vmatprep.subr.mxu0 0.0
        %1860 = vmatpush1.msra.mxu0 0.0
        %1861 = vmatprep.subr.mxu0 0.0
        %1862 = vmatpush1.msra.mxu0 0.0
        %1863 = vmatprep.subr.mxu0 0.0
        %1864 = vmatpush1.msra.mxu0 0.0
        %1865 = vmatprep.subr.mxu0 0.0
        %1866 = vmatpush1.msra.mxu0 0.0
        %1867 = vmatprep.subr.mxu0 0.0
        %1868 = vmatpush1.msra.mxu0 0.0
        %1869 = vmatprep.subr.mxu0 0.0
        %1870 = vmatpush1.msra.mxu0 0.0
        %1871 = vmatprep.subr.mxu0 0.0
        %1872 = vmatpush1.msra.mxu0 0.0
        %1873 = vmatprep.subr.mxu0 0.0
        %1874 = vmatpush1.msra.mxu0 0.0
        %1875 = vmatprep.subr.mxu0 0.0
        %1876 = vmatpush1.msra.mxu0 0.0
        %1877 = vmatprep.subr.mxu0 0.0
        %1878 = vmatpush1.msra.mxu0 0.0
        %1879 = vmatprep.subr.mxu0 0.0
        %1880 = vmatpush1.msra.mxu0 0.0
        %1881 = vmatprep.subr.mxu0 0.0
        %1882 = vmatpush1.msra.mxu0 0.0
        %1883 = vmatprep.subr.mxu0 0.0
        %1884 = vmatpush1.msra.mxu0 0.0
        %1885 = vmatprep.subr.mxu0 0.0
        %1886 = vmatpush1.msra.mxu0 0.0
        %1887 = vmatprep.subr.mxu0 0.0
        %1888 = vmatpush1.msra.mxu0 0.0
        %1889 = vmatprep.subr.mxu0 0.0
        %1890 = vmatpush1.msra.mxu0 0.0
        %1891 = vmatprep.subr.mxu0 0.0
        %1892 = vmatpush1.msra.mxu0 0.0
        %1893 = vmatprep.subr.mxu0 0.0
        %1894 = vmatpush1.msra.mxu0 0.0
        %1895 = vmatprep.subr.mxu0 0.0
        %1896 = vmatpush1.msra.mxu0 0.0
        %1897 = vmatprep.subr.mxu0 0.0
        %1898 = vmatpush1.msra.mxu0 0.0
        %1899 = vmatprep.mubr.f32.mxu0 0.0
        %1900 = vmatmul.mubr.f32.gmra.mrb[0].mxu0 %v1762
        %v1901 = vpop.f32.mrb[0].mxu0
        %v1902 = vadd.f32 %v1759, %v1901
        %v1903 = vpop.f32.mrb[0].mxu0
        %v1904 = vadd.f32 %v1759, %v1903
        %1905 = vdwg.mxu0
        %v1906 = vtanh.pop %v1677
        %v1907 = vtanh.pop %v1679
        %v1908 = vtanh.pop %v1748
        %v1909 = vtanh.pop %v1750
        %v1910 = vmul.f32 %v1831, 0.5
        %v1911 = vmul.f32 %v1833, 0.5
        %v1912 = vmul.f32 %v1902, 0.5
        %v1913 = vmul.f32 %v1904, 0.5
        %v1914 = vtanh.pop %v1910
        %v1915 = vtanh.pop %v1911
        %v1916 = vtanh.pop %v1912
        %v1917 = vtanh.pop %v1913
        %v1918 = vmul.f32 %v1914, 0.5
        %v1919 = vmul.f32 %v1915, 0.5
        %v1920 = vmul.f32 %v1916, 0.5
        %v1921 = vmul.f32 %v1917, 0.5
        %v1922 = vadd.f32 %v1918, 0.5
        %v1923 = vadd.f32 %v1919, 0.5
        %v1924 = vadd.f32 %v1920, 0.5
        %v1925 = vadd.f32 %v1921, 0.5
        %v1926 = vmul.f32 %v1906, %v1922
        %v1927 = vmul.f32 %v1907, %v1923
        %v1928 = vmul.f32 %v1908, %v1924
        %v1929 = vmul.f32 %v1909, %v1925
        %s1930 = scalar_lea.vmem %s9, 16
        %v1931 = vld [vmem:[%s1930] sm:$0xff]
        %1933 = vset.pattern.permute.xlu0 0
        %1934 = vperm.xlu0 %1933, %v1931
        %v1935 = vpop.permute.xlu0 %1934
        %v1937 = vmul.f32 %v1935, %v1927
        %v1938 = vmul.f32 %v1935, %v1929
        %v1939 = vadd.f32 %v1410, %v1937
        %v1940 = vadd.f32 %v1411, %v1938
        %s1941 = scalar_lea.vmem %s7, 16
        %v1942 = vld [vmem:[%s1941] sm:$0xff]
        %s1943 = scalar_lea.vmem %s8, 16
        %v1944 = vld [vmem:[%s1943] sm:$0xff]
        %1946 = vset.pattern.permute.xlu0 0
        %1947 = vperm.xlu0 %1946, %v1944
        %v1948 = vpop.permute.xlu0 %1947
        %v1951 = vsel %vm890, %v1942, 0
        %1953 = vmatprep.subr.mxu0 %v1927
        %1954 = vmatpush1.msra.mxu0 %v1926
        %1955 = vmatprep.subr.mxu0 0.0
        %1956 = vmatpush1.msra.mxu0 0.0
        %1957 = vmatprep.subr.mxu0 0.0
        %1958 = vmatpush1.msra.mxu0 0.0
        %1959 = vmatprep.subr.mxu0 0.0
        %1960 = vmatpush1.msra.mxu0 0.0
        %1961 = vmatprep.subr.mxu0 0.0
        %1962 = vmatpush1.msra.mxu0 0.0
        %1963 = vmatprep.subr.mxu0 0.0
        %1964 = vmatpush1.msra.mxu0 0.0
        %1965 = vmatprep.subr.mxu0 0.0
        %1966 = vmatpush1.msra.mxu0 0.0
        %1967 = vmatprep.subr.mxu0 0.0
        %1968 = vmatpush1.msra.mxu0 0.0
        %1969 = vmatprep.subr.mxu0 0.0
        %1970 = vmatpush1.msra.mxu0 0.0
        %1971 = vmatprep.subr.mxu0 0.0
        %1972 = vmatpush1.msra.mxu0 0.0
        %1973 = vmatprep.subr.mxu0 0.0
        %1974 = vmatpush1.msra.mxu0 0.0
        %1975 = vmatprep.subr.mxu0 0.0
        %1976 = vmatpush1.msra.mxu0 0.0
        %1977 = vmatprep.subr.mxu0 0.0
        %1978 = vmatpush1.msra.mxu0 0.0
        %1979 = vmatprep.subr.mxu0 0.0
        %1980 = vmatpush1.msra.mxu0 0.0
        %1981 = vmatprep.subr.mxu0 0.0
        %1982 = vmatpush1.msra.mxu0 0.0
        %1983 = vmatprep.subr.mxu0 0.0
        %1984 = vmatpush1.msra.mxu0 0.0
        %1985 = vmatprep.subr.mxu0 0.0
        %1986 = vmatpush1.msra.mxu0 0.0
        %1987 = vmatprep.subr.mxu0 0.0
        %1988 = vmatpush1.msra.mxu0 0.0
        %1989 = vmatprep.subr.mxu0 0.0
        %1990 = vmatpush1.msra.mxu0 0.0
        %1991 = vmatprep.subr.mxu0 0.0
        %1992 = vmatpush1.msra.mxu0 0.0
        %1993 = vmatprep.subr.mxu0 0.0
        %1994 = vmatpush1.msra.mxu0 0.0
        %1995 = vmatprep.subr.mxu0 0.0
        %1996 = vmatpush1.msra.mxu0 0.0
        %1997 = vmatprep.subr.mxu0 0.0
        %1998 = vmatpush1.msra.mxu0 0.0
        %1999 = vmatprep.subr.mxu0 0.0
        %2000 = vmatpush1.msra.mxu0 0.0
        %2001 = vmatprep.subr.mxu0 0.0
        %2002 = vmatpush1.msra.mxu0 0.0
        %2003 = vmatprep.subr.mxu0 0.0
        %2004 = vmatpush1.msra.mxu0 0.0
        %2005 = vmatprep.subr.mxu0 0.0
        %2006 = vmatpush1.msra.mxu0 0.0
        %2007 = vmatprep.subr.mxu0 0.0
        %2008 = vmatpush1.msra.mxu0 0.0
        %2009 = vmatprep.subr.mxu0 0.0
        %2010 = vmatpush1.msra.mxu0 0.0
        %2011 = vmatprep.subr.mxu0 0.0
        %2012 = vmatpush1.msra.mxu0 0.0
        %2013 = vmatprep.subr.mxu0 0.0
        %2014 = vmatpush1.msra.mxu0 0.0
        %2015 = vmatprep.subr.mxu0 0.0
        %2016 = vmatpush1.msra.mxu0 0.0
        %2017 = vmatprep.mubr.f32.mxu0 0.0
        %2018 = vmatmul.mubr.f32.gmra.mrb[0].mxu0 %v1951
        %v2019 = vpop.f32.mrb[0].mxu0
        %v2020 = vadd.f32 %v1948, %v2019
        %v2021 = vpop.f32.mrb[0].mxu0
        %v2022 = vadd.f32 %v1948, %v2021
        %2023 = vdwg.mxu0
        %2024 = vmatprep.subr.mxu0 %v1929
        %2025 = vmatpush1.msra.mxu0 %v1928
        %2026 = vmatprep.subr.mxu0 0.0
        %2027 = vmatpush1.msra.mxu0 0.0
        %2028 = vmatprep.subr.mxu0 0.0
        %2029 = vmatpush1.msra.mxu0 0.0
        %2030 = vmatprep.subr.mxu0 0.0
        %2031 = vmatpush1.msra.mxu0 0.0
        %2032 = vmatprep.subr.mxu0 0.0
        %2033 = vmatpush1.msra.mxu0 0.0
        %2034 = vmatprep.subr.mxu0 0.0
        %2035 = vmatpush1.msra.mxu0 0.0
        %2036 = vmatprep.subr.mxu0 0.0
        %2037 = vmatpush1.msra.mxu0 0.0
        %2038 = vmatprep.subr.mxu0 0.0
        %2039 = vmatpush1.msra.mxu0 0.0
        %2040 = vmatprep.subr.mxu0 0.0
        %2041 = vmatpush1.msra.mxu0 0.0
        %2042 = vmatprep.subr.mxu0 0.0
        %2043 = vmatpush1.msra.mxu0 0.0
        %2044 = vmatprep.subr.mxu0 0.0
        %2045 = vmatpush1.msra.mxu0 0.0
        %2046 = vmatprep.subr.mxu0 0.0
        %2047 = vmatpush1.msra.mxu0 0.0
        %2048 = vmatprep.subr.mxu0 0.0
        %2049 = vmatpush1.msra.mxu0 0.0
        %2050 = vmatprep.subr.mxu0 0.0
        %2051 = vmatpush1.msra.mxu0 0.0
        %2052 = vmatprep.subr.mxu0 0.0
        %2053 = vmatpush1.msra.mxu0 0.0
        %2054 = vmatprep.subr.mxu0 0.0
        %2055 = vmatpush1.msra.mxu0 0.0
        %2056 = vmatprep.subr.mxu0 0.0
        %2057 = vmatpush1.msra.mxu0 0.0
        %2058 = vmatprep.subr.mxu0 0.0
        %2059 = vmatpush1.msra.mxu0 0.0
        %2060 = vmatprep.subr.mxu0 0.0
        %2061 = vmatpush1.msra.mxu0 0.0
        %2062 = vmatprep.subr.mxu0 0.0
        %2063 = vmatpush1.msra.mxu0 0.0
        %2064 = vmatprep.subr.mxu0 0.0
        %2065 = vmatpush1.msra.mxu0 0.0
        %2066 = vmatprep.subr.mxu0 0.0
        %2067 = vmatpush1.msra.mxu0 0.0
        %2068 = vmatprep.subr.mxu0 0.0
        %2069 = vmatpush1.msra.mxu0 0.0
        %2070 = vmatprep.subr.mxu0 0.0
        %2071 = vmatpush1.msra.mxu0 0.0
        %2072 = vmatprep.subr.mxu0 0.0
        %2073 = vmatpush1.msra.mxu0 0.0
        %2074 = vmatprep.subr.mxu0 0.0
        %2075 = vmatpush1.msra.mxu0 0.0
        %2076 = vmatprep.subr.mxu0 0.0
        %2077 = vmatpush1.msra.mxu0 0.0
        %2078 = vmatprep.subr.mxu0 0.0
        %2079 = vmatpush1.msra.mxu0 0.0
        %2080 = vmatprep.subr.mxu0 0.0
        %2081 = vmatpush1.msra.mxu0 0.0
        %2082 = vmatprep.subr.mxu0 0.0
        %2083 = vmatpush1.msra.mxu0 0.0
        %2084 = vmatprep.subr.mxu0 0.0
        %2085 = vmatpush1.msra.mxu0 0.0
        %2086 = vmatprep.subr.mxu0 0.0
        %2087 = vmatpush1.msra.mxu0 0.0
        %2088 = vmatprep.mubr.f32.mxu0 0.0
        %2089 = vmatmul.mubr.f32.gmra.mrb[0].mxu0 %v1951
        %v2090 = vpop.f32.mrb[0].mxu0
        %v2091 = vadd.f32 %v1948, %v2090
        %v2092 = vpop.f32.mrb[0].mxu0
        %v2093 = vadd.f32 %v1948, %v2092
        %2094 = vdwg.mxu0
        %v2095 = vadd.f32 %v2020, %v1570
        %v2096 = vadd.f32 %v2022, %v1571
        %v2097 = vadd.f32 %v2091, %v1572
        %v2098 = vadd.f32 %v2093, %v1573
        %v2099 = vsel %vm469, %v2095, 0.0
        %v2100 = vsel %vm470, %v2096, 0.0
        %v2101 = vsel %vm471, %v2097, 0.0
        %v2102 = vsel %vm472, %v2098, 0.0
        %2103 = vrot.lane.b32.xlu0 %v2099, 4
        %v2104 = vpop.permute.xlu0 %2103
        %2105 = vrot.lane.b32.xlu0 %v2100, 4
        %v2106 = vpop.permute.xlu0 %2105
        %2107 = vrot.lane.b32.xlu0 %v2101, 4
        %v2108 = vpop.permute.xlu0 %2107
        %2109 = vrot.lane.b32.xlu0 %v2102, 4
        %v2110 = vpop.permute.xlu0 %2109
        %v2111 = vsel %vm1052, %v2108, %v2110
        %v2112 = vsel %vm1052, %v2106, %v2108
        %v2113 = vsel %vm1052, %v2104, %v2106
        %v2114 = vsel %vm1052, %v2110, %v2104
        %2115 = vrot.lane.b32.xlu0 %v2099, 2
        %v2116 = vpop.permute.xlu0 %2115
        %2117 = vrot.lane.b32.xlu0 %v2100, 2
        %v2118 = vpop.permute.xlu0 %2117
        %2119 = vrot.lane.b32.xlu0 %v2101, 2
        %v2120 = vpop.permute.xlu0 %2119
        %2121 = vrot.lane.b32.xlu0 %v2102, 2
        %v2122 = vpop.permute.xlu0 %2121
        %v2123 = vsel %vm526, %v2120, %v2122
        %v2124 = vsel %vm526, %v2118, %v2120
        %v2125 = vsel %vm526, %v2116, %v2118
        %v2126 = vsel %vm526, %v2122, %v2116
        %s2127 = scalar_lea.vmem %s3, 24
        %v2128 = vld [vmem:[%s2127] sm:$0xff]
        %s2129 = scalar_lea.vmem %s4, 24
        %v2130 = vld [vmem:[%s2129] sm:$0xff]
        %2132 = vset.pattern.permute.xlu0 0
        %2133 = vperm.xlu0 %2132, %v2130
        %v2134 = vpop.permute.xlu0 %2133
        %v2137 = vsel %vm551, %v2128, 0
        %2139 = vmatprep.subr.mxu0 %v2113
        %2140 = vmatpush1.msra.mxu0 %v2114
        %2141 = vmatprep.subr.mxu0 %v2125
        %2142 = vmatpush1.msra.mxu0 %v2126
        %2143 = vmatprep.subr.mxu0 %v2100
        %2144 = vmatpush1.msra.mxu0 %v2099
        %2145 = vmatprep.subr.mxu0 0.0
        %2146 = vmatpush1.msra.mxu0 0.0
        %2147 = vmatprep.subr.mxu0 0.0
        %2148 = vmatpush1.msra.mxu0 0.0
        %2149 = vmatprep.subr.mxu0 0.0
        %2150 = vmatpush1.msra.mxu0 0.0
        %2151 = vmatprep.subr.mxu0 0.0
        %2152 = vmatpush1.msra.mxu0 0.0
        %2153 = vmatprep.subr.mxu0 0.0
        %2154 = vmatpush1.msra.mxu0 0.0
        %2155 = vmatprep.subr.mxu0 0.0
        %2156 = vmatpush1.msra.mxu0 0.0
        %2157 = vmatprep.subr.mxu0 0.0
        %2158 = vmatpush1.msra.mxu0 0.0
        %2159 = vmatprep.subr.mxu0 0.0
        %2160 = vmatpush1.msra.mxu0 0.0
        %2161 = vmatprep.subr.mxu0 0.0
        %2162 = vmatpush1.msra.mxu0 0.0
        %2163 = vmatprep.subr.mxu0 0.0
        %2164 = vmatpush1.msra.mxu0 0.0
        %2165 = vmatprep.subr.mxu0 0.0
        %2166 = vmatpush1.msra.mxu0 0.0
        %2167 = vmatprep.subr.mxu0 0.0
        %2168 = vmatpush1.msra.mxu0 0.0
        %2169 = vmatprep.subr.mxu0 0.0
        %2170 = vmatpush1.msra.mxu0 0.0
        %2171 = vmatprep.subr.mxu0 0.0
        %2172 = vmatpush1.msra.mxu0 0.0
        %2173 = vmatprep.subr.mxu0 0.0
        %2174 = vmatpush1.msra.mxu0 0.0
        %2175 = vmatprep.subr.mxu0 0.0
        %2176 = vmatpush1.msra.mxu0 0.0
        %2177 = vmatprep.subr.mxu0 0.0
        %2178 = vmatpush1.msra.mxu0 0.0
        %2179 = vmatprep.subr.mxu0 0.0
        %2180 = vmatpush1.msra.mxu0 0.0
        %2181 = vmatprep.subr.mxu0 0.0
        %2182 = vmatpush1.msra.mxu0 0.0
        %2183 = vmatprep.subr.mxu0 0.0
        %2184 = vmatpush1.msra.mxu0 0.0
        %2185 = vmatprep.subr.mxu0 0.0
        %2186 = vmatpush1.msra.mxu0 0.0
        %2187 = vmatprep.subr.mxu0 0.0
        %2188 = vmatpush1.msra.mxu0 0.0
        %2189 = vmatprep.subr.mxu0 0.0
        %2190 = vmatpush1.msra.mxu0 0.0
        %2191 = vmatprep.subr.mxu0 0.0
        %2192 = vmatpush1.msra.mxu0 0.0
        %2193 = vmatprep.subr.mxu0 0.0
        %2194 = vmatpush1.msra.mxu0 0.0
        %2195 = vmatprep.subr.mxu0 0.0
        %2196 = vmatpush1.msra.mxu0 0.0
        %2197 = vmatprep.subr.mxu0 0.0
        %2198 = vmatpush1.msra.mxu0 0.0
        %2199 = vmatprep.subr.mxu0 0.0
        %2200 = vmatpush1.msra.mxu0 0.0
        %2201 = vmatprep.subr.mxu0 0.0
        %2202 = vmatpush1.msra.mxu0 0.0
        %2203 = vmatprep.mubr.f32.mxu0 0.0
        %2204 = vmatmul.mubr.f32.gmra.mrb[0].mxu0 %v2137
        %v2205 = vpop.f32.mrb[0].mxu0
        %v2206 = vpop.f32.mrb[0].mxu0
        %v2207 = vadd.f32 %v2134, %v2206
        %2208 = vdwg.mxu0
        %2209 = vmatprep.subr.mxu0 %v2111
        %2210 = vmatpush1.msra.mxu0 %v2112
        %2211 = vmatprep.subr.mxu0 %v2123
        %2212 = vmatpush1.msra.mxu0 %v2124
        %2213 = vmatprep.subr.mxu0 %v2102
        %2214 = vmatpush1.msra.mxu0 %v2101
        %2215 = vmatprep.subr.mxu0 0.0
        %2216 = vmatpush1.msra.mxu0 0.0
        %2217 = vmatprep.subr.mxu0 0.0
        %2218 = vmatpush1.msra.mxu0 0.0
        %2219 = vmatprep.subr.mxu0 0.0
        %2220 = vmatpush1.msra.mxu0 0.0
        %2221 = vmatprep.subr.mxu0 0.0
        %2222 = vmatpush1.msra.mxu0 0.0
        %2223 = vmatprep.subr.mxu0 0.0
        %2224 = vmatpush1.msra.mxu0 0.0
        %2225 = vmatprep.subr.mxu0 0.0
        %2226 = vmatpush1.msra.mxu0 0.0
        %2227 = vmatprep.subr.mxu0 0.0
        %2228 = vmatpush1.msra.mxu0 0.0
        %2229 = vmatprep.subr.mxu0 0.0
        %2230 = vmatpush1.msra.mxu0 0.0
        %2231 = vmatprep.subr.mxu0 0.0
        %2232 = vmatpush1.msra.mxu0 0.0
        %2233 = vmatprep.subr.mxu0 0.0
        %2234 = vmatpush1.msra.mxu0 0.0
        %2235 = vmatprep.subr.mxu0 0.0
        %2236 = vmatpush1.msra.mxu0 0.0
        %2237 = vmatprep.subr.mxu0 0.0
        %2238 = vmatpush1.msra.mxu0 0.0
        %2239 = vmatprep.subr.mxu0 0.0
        %2240 = vmatpush1.msra.mxu0 0.0
        %2241 = vmatprep.subr.mxu0 0.0
        %2242 = vmatpush1.msra.mxu0 0.0
        %2243 = vmatprep.subr.mxu0 0.0
        %2244 = vmatpush1.msra.mxu0 0.0
        %2245 = vmatprep.subr.mxu0 0.0
        %2246 = vmatpush1.msra.mxu0 0.0
        %2247 = vmatprep.subr.mxu0 0.0
        %2248 = vmatpush1.msra.mxu0 0.0
        %2249 = vmatprep.subr.mxu0 0.0
        %2250 = vmatpush1.msra.mxu0 0.0
        %2251 = vmatprep.subr.mxu0 0.0
        %2252 = vmatpush1.msra.mxu0 0.0
        %2253 = vmatprep.subr.mxu0 0.0
        %2254 = vmatpush1.msra.mxu0 0.0
        %2255 = vmatprep.subr.mxu0 0.0
        %2256 = vmatpush1.msra.mxu0 0.0
        %2257 = vmatprep.subr.mxu0 0.0
        %2258 = vmatpush1.msra.mxu0 0.0
        %2259 = vmatprep.subr.mxu0 0.0
        %2260 = vmatpush1.msra.mxu0 0.0
        %2261 = vmatprep.subr.mxu0 0.0
        %2262 = vmatpush1.msra.mxu0 0.0
        %2263 = vmatprep.subr.mxu0 0.0
        %2264 = vmatpush1.msra.mxu0 0.0
        %2265 = vmatprep.subr.mxu0 0.0
        %2266 = vmatpush1.msra.mxu0 0.0
        %2267 = vmatprep.subr.mxu0 0.0
        %2268 = vmatpush1.msra.mxu0 0.0
        %2269 = vmatprep.subr.mxu0 0.0
        %2270 = vmatpush1.msra.mxu0 0.0
        %2271 = vmatprep.subr.mxu0 0.0
        %2272 = vmatpush1.msra.mxu0 0.0
        %2273 = vmatprep.mubr.f32.mxu0 0.0
        %2274 = vmatmul.mubr.f32.gmra.mrb[0].mxu0 %v2137
        %v2275 = vpop.f32.mrb[0].mxu0
        %v2276 = vpop.f32.mrb[0].mxu0
        %v2277 = vadd.f32 %v2134, %v2276
        %2278 = vdwg.mxu0
        %s2279 = scalar_lea.vmem %s5, 24
        %v2280 = vld [vmem:[%s2279] sm:$0xff]
        %s2281 = scalar_lea.vmem %s6, 24
        %v2282 = vld [vmem:[%s2281] sm:$0xff]
        %2284 = vset.pattern.permute.xlu0 0
        %2285 = vperm.xlu0 %2284, %v2282
        %v2286 = vpop.permute.xlu0 %2285
        %v2289 = vsel %vm551, %v2280, 0
        %2291 = vmatprep.subr.mxu0 %v2113
        %2292 = vmatpush1.msra.mxu0 %v2114
        %2293 = vmatprep.subr.mxu0 %v2125
        %2294 = vmatpush1.msra.mxu0 %v2126
        %2295 = vmatprep.subr.mxu0 %v2100
        %2296 = vmatpush1.msra.mxu0 %v2099
        %2297 = vmatprep.subr.mxu0 0.0
        %2298 = vmatpush1.msra.mxu0 0.0
        %2299 = vmatprep.subr.mxu0 0.0
        %2300 = vmatpush1.msra.mxu0 0.0
        %2301 = vmatprep.subr.mxu0 0.0
        %2302 = vmatpush1.msra.mxu0 0.0
        %2303 = vmatprep.subr.mxu0 0.0
        %2304 = vmatpush1.msra.mxu0 0.0
        %2305 = vmatprep.subr.mxu0 0.0
        %2306 = vmatpush1.msra.mxu0 0.0
        %2307 = vmatprep.subr.mxu0 0.0
        %2308 = vmatpush1.msra.mxu0 0.0
        %2309 = vmatprep.subr.mxu0 0.0
        %2310 = vmatpush1.msra.mxu0 0.0
        %2311 = vmatprep.subr.mxu0 0.0
        %2312 = vmatpush1.msra.mxu0 0.0
        %2313 = vmatprep.subr.mxu0 0.0
        %2314 = vmatpush1.msra.mxu0 0.0
        %2315 = vmatprep.subr.mxu0 0.0
        %2316 = vmatpush1.msra.mxu0 0.0
        %2317 = vmatprep.subr.mxu0 0.0
        %2318 = vmatpush1.msra.mxu0 0.0
        %2319 = vmatprep.subr.mxu0 0.0
        %2320 = vmatpush1.msra.mxu0 0.0
        %2321 = vmatprep.subr.mxu0 0.0
        %2322 = vmatpush1.msra.mxu0 0.0
        %2323 = vmatprep.subr.mxu0 0.0
        %2324 = vmatpush1.msra.mxu0 0.0
        %2325 = vmatprep.subr.mxu0 0.0
        %2326 = vmatpush1.msra.mxu0 0.0
        %2327 = vmatprep.subr.mxu0 0.0
        %2328 = vmatpush1.msra.mxu0 0.0
        %2329 = vmatprep.subr.mxu0 0.0
        %2330 = vmatpush1.msra.mxu0 0.0
        %2331 = vmatprep.subr.mxu0 0.0
        %2332 = vmatpush1.msra.mxu0 0.0
        %2333 = vmatprep.subr.mxu0 0.0
        %2334 = vmatpush1.msra.mxu0 0.0
        %2335 = vmatprep.subr.mxu0 0.0
        %2336 = vmatpush1.msra.mxu0 0.0
        %2337 = vmatprep.subr.mxu0 0.0
        %2338 = vmatpush1.msra.mxu0 0.0
        %2339 = vmatprep.subr.mxu0 0.0
        %2340 = vmatpush1.msra.mxu0 0.0
        %2341 = vmatprep.subr.mxu0 0.0
        %2342 = vmatpush1.msra.mxu0 0.0
        %2343 = vmatprep.subr.mxu0 0.0
        %2344 = vmatpush1.msra.mxu0 0.0
        %2345 = vmatprep.subr.mxu0 0.0
        %2346 = vmatpush1.msra.mxu0 0.0
        %2347 = vmatprep.subr.mxu0 0.0
        %2348 = vmatpush1.msra.mxu0 0.0
        %2349 = vmatprep.subr.mxu0 0.0
        %2350 = vmatpush1.msra.mxu0 0.0
        %2351 = vmatprep.subr.mxu0 0.0
        %2352 = vmatpush1.msra.mxu0 0.0
        %2353 = vmatprep.subr.mxu0 0.0
        %2354 = vmatpush1.msra.mxu0 0.0
        %2355 = vmatprep.mubr.f32.mxu0 0.0
        %2356 = vmatmul.mubr.f32.gmra.mrb[0].mxu0 %v2289
        %v2357 = vpop.f32.mrb[0].mxu0
        %v2358 = vpop.f32.mrb[0].mxu0
        %v2359 = vadd.f32 %v2286, %v2358
        %2360 = vdwg.mxu0
        %2361 = vmatprep.subr.mxu0 %v2111
        %2362 = vmatpush1.msra.mxu0 %v2112
        %2363 = vmatprep.subr.mxu0 %v2123
        %2364 = vmatpush1.msra.mxu0 %v2124
        %2365 = vmatprep.subr.mxu0 %v2102
        %2366 = vmatpush1.msra.mxu0 %v2101
        %2367 = vmatprep.subr.mxu0 0.0
        %2368 = vmatpush1.msra.mxu0 0.0
        %2369 = vmatprep.subr.mxu0 0.0
        %2370 = vmatpush1.msra.mxu0 0.0
        %2371 = vmatprep.subr.mxu0 0.0
        %2372 = vmatpush1.msra.mxu0 0.0
        %2373 = vmatprep.subr.mxu0 0.0
        %2374 = vmatpush1.msra.mxu0 0.0
        %2375 = vmatprep.subr.mxu0 0.0
        %2376 = vmatpush1.msra.mxu0 0.0
        %2377 = vmatprep.subr.mxu0 0.0
        %2378 = vmatpush1.msra.mxu0 0.0
        %2379 = vmatprep.subr.mxu0 0.0
        %2380 = vmatpush1.msra.mxu0 0.0
        %2381 = vmatprep.subr.mxu0 0.0
        %2382 = vmatpush1.msra.mxu0 0.0
        %2383 = vmatprep.subr.mxu0 0.0
        %2384 = vmatpush1.msra.mxu0 0.0
        %2385 = vmatprep.subr.mxu0 0.0
        %2386 = vmatpush1.msra.mxu0 0.0
        %2387 = vmatprep.subr.mxu0 0.0
        %2388 = vmatpush1.msra.mxu0 0.0
        %2389 = vmatprep.subr.mxu0 0.0
        %2390 = vmatpush1.msra.mxu0 0.0
        %2391 = vmatprep.subr.mxu0 0.0
        %2392 = vmatpush1.msra.mxu0 0.0
        %2393 = vmatprep.subr.mxu0 0.0
        %2394 = vmatpush1.msra.mxu0 0.0
        %2395 = vmatprep.subr.mxu0 0.0
        %2396 = vmatpush1.msra.mxu0 0.0
        %2397 = vmatprep.subr.mxu0 0.0
        %2398 = vmatpush1.msra.mxu0 0.0
        %2399 = vmatprep.subr.mxu0 0.0
        %2400 = vmatpush1.msra.mxu0 0.0
        %2401 = vmatprep.subr.mxu0 0.0
        %2402 = vmatpush1.msra.mxu0 0.0
        %2403 = vmatprep.subr.mxu0 0.0
        %2404 = vmatpush1.msra.mxu0 0.0
        %2405 = vmatprep.subr.mxu0 0.0
        %2406 = vmatpush1.msra.mxu0 0.0
        %2407 = vmatprep.subr.mxu0 0.0
        %2408 = vmatpush1.msra.mxu0 0.0
        %2409 = vmatprep.subr.mxu0 0.0
        %2410 = vmatpush1.msra.mxu0 0.0
        %2411 = vmatprep.subr.mxu0 0.0
        %2412 = vmatpush1.msra.mxu0 0.0
        %2413 = vmatprep.subr.mxu0 0.0
        %2414 = vmatpush1.msra.mxu0 0.0
        %2415 = vmatprep.subr.mxu0 0.0
        %2416 = vmatpush1.msra.mxu0 0.0
        %2417 = vmatprep.subr.mxu0 0.0
        %2418 = vmatpush1.msra.mxu0 0.0
        %2419 = vmatprep.subr.mxu0 0.0
        %2420 = vmatpush1.msra.mxu0 0.0
        %2421 = vmatprep.subr.mxu0 0.0
        %2422 = vmatpush1.msra.mxu0 0.0
        %2423 = vmatprep.subr.mxu0 0.0
        %2424 = vmatpush1.msra.mxu0 0.0
        %2425 = vmatprep.mubr.f32.mxu0 0.0
        %2426 = vmatmul.mubr.f32.gmra.mrb[0].mxu0 %v2289
        %v2427 = vpop.f32.mrb[0].mxu0
        %v2428 = vpop.f32.mrb[0].mxu0
        %v2429 = vadd.f32 %v2286, %v2428
        %2430 = vdwg.mxu0
        %v2431 = vtanh.pop %v2207
        %v2432 = vtanh.pop %v2277
        %v2433 = vmul.f32 %v2359, 0.5
        %v2434 = vmul.f32 %v2429, 0.5
        %v2435 = vtanh.pop %v2433
        %v2436 = vtanh.pop %v2434
        %v2437 = vmul.f32 %v2435, 0.5
        %v2438 = vmul.f32 %v2436, 0.5
        %v2439 = vadd.f32 %v2437, 0.5
        %v2440 = vadd.f32 %v2438, 0.5
        %v2441 = vmul.f32 %v2431, %v2439
        %v2442 = vmul.f32 %v2432, %v2440
        %s2443 = scalar_lea.vmem %s9, 24
        %v2444 = vld [vmem:[%s2443] sm:$0xff]
        %2446 = vset.pattern.permute.xlu0 0
        %2447 = vperm.xlu0 %2446, %v2444
        %v2448 = vpop.permute.xlu0 %2447
        %v2450 = vmul.f32 %v2448, %v2441
        %v2451 = vmul.f32 %v2448, %v2442
        %v2452 = vadd.f32 %v1939, %v2450
        %v2453 = vadd.f32 %v1940, %v2451
        %v2454 = vrot.slane %v2452, 4
        %v2455 = vadd.f32 %v2452, %v2454
        %v2456 = vrot.slane %v2455, 2
        %v2457 = vadd.f32 %v2455, %v2456
        %v2458 = vrot.slane %v2457, 1
        %v2459 = vadd.f32 %v2457, %v2458
        %v2460 = vrot.slane %v2453, 4
        %v2461 = vadd.f32 %v2453, %v2460
        %v2462 = vrot.slane %v2461, 2
        %v2463 = vadd.f32 %v2461, %v2462
        %v2464 = vrot.slane %v2463, 1
        %v2465 = vadd.f32 %v2463, %v2464
        %v2466 = vld [vmem:[#allocation2] sm:$0x1]
        %2468 = vset.pattern.permute.xlu0 0
        %2469 = vperm.xlu0 %2468, %v2466
        %v2470 = vpop.permute.xlu0 %2469
        %v2472 = vlaneseq
        %v2473 = vshrl.u32 %v2472, 7
        %v2474 = vsub.s32 0, %v2473
        %v2475 = vrot.slane %v2470, %v2474
        %v2476 = vadd.f32 %v2459, %v2475
        %v2477 = vadd.f32 %v2465, %v2475
        %v2480 = vcombine.low %v2476, %v2477
        %v2482 = vunpack.c.l.s4 1966171168
        %v2483 = vunpack.c.0.s8 %v2482
        %v2484 = vlaneseq
        %v2485 = vshrl.u32 %v2484, 7
        %v2486 = vsub.s32 %v2483, %v2485
        %v2487 = vrot.slane %v2480, %v2486
        %v2489 = vunpack.c.l.s4 1966171168
        %v2490 = vunpack.c.0.s8 %v2489
        %v2491 = vlaneseq
        %v2492 = vshrl.u32 %v2491, 7
        %v2493 = vsub.s32 %v2490, %v2492
        %v2494 = vrot.slane %v2487, %v2493
        %v2496 = vlaneseq
        %vm2497 = vcmp.ge.s32.totalorder %v2496, 0
        %vm2498 = vcmp.lt.s32.totalorder %v2496, 256
        %vm2499 = vmand %vm2497, %vm2498
        %2500 = vst.msk [vmem:[%s403] sm:$0x3] %vm2499, %v2494
        %s2501 = sand.u32 %s287, 1
        %s2502 = scalar_lea.sflag [#allocation4], %s2501
        %s2503 = sand.u32 %s287, 1
        %s2504 = smul.addr %s2503, 2
        %s2505 = scalar_lea.vmem [#allocation3], %s2504
        // Predicated region
        $region65: #{tpu_custom_call.1} parent=63 // pred_check
          %p2506 = pneg %p297
        $region66: #{tpu_custom_call.1} parent=63 // pred_check_branch
          %2508 = sbr.rel (%p2506) target = $region68
        $region67: #{tpu_custom_call.1} parent=63 // pred_region
          %s2510 = ssub.s32 32, 32
          %2511 = vsyncadd %s2502, %s2510
          %s2512 = smul.addr %s32, 2
          %s2513 = smul.addr %s31, 4
          %s2514 = sadd.s32 %s2512, %s2513
          %s2515 = smul.addr %s2514, 16
          %s2516 = scalar_lea.hbm %s11, %s2515
          %s2518 = sshll.u32 %s2505, 4
          %s2519 = int_to_ptr.vmem [resolvable:$true] %s2518
          %2521 = dma.vmem_to_hbm [thread:$0]  %s2519, 32, %s2516, %s2502
        $region68: #{tpu_custom_call.1} parent=63 // pred_fallthru
          _
      $region64: #{tpu_custom_call.1} parent=5 // pred_fallthru
        _
      %p2522 = scmp.le.s32.totalorder 2, %s22
      // Predicated region
      $region69: #{tpu_custom_call.1} parent=5 // pred_check
        %p2523 = pneg %p2522
      $region70: #{tpu_custom_call.1} parent=5 // pred_check_branch
        %2525 = sbr.rel (%p2523) target = $region72
      $region71: #{tpu_custom_call.1} parent=5 // pred_region
        %s2526 = ssub.s32 %s22, 2
        // Predicated region
        $region73: #{tpu_custom_call.1} parent=71 // pred_check
          %p2527 = pneg %p303
        $region74: #{tpu_custom_call.1} parent=71 // pred_check_branch
          %2529 = sbr.rel (%p2527) target = $region76
        $region75: #{tpu_custom_call.1} parent=71 // pred_region
          %s2530 = sand.u32 %s288, 1
          %s2531 = scalar_lea.sflag [#allocation4], %s2530
          %s2532 = sand.u32 %s288, 1
          %s2533 = smul.addr %s2532, 2
          %s2534 = scalar_lea.vmem [#allocation3], %s2533
          %2535 = dma.done %s2531, 32
        $region76: #{tpu_custom_call.1} parent=71 // pred_fallthru
          _
      $region72: #{tpu_custom_call.1} parent=5 // pred_fallthru
        _
    $region6: #{tpu_custom_call.1} parent=1 // loop_footer
      %s26 = sadd.s32 1, %s22
    $region7: #{tpu_custom_call.1} parent=1 // loop_footer_branch
      %21 = sbr.rel target = $region3
    $region8: #{tpu_custom_call.1} parent=1 // loop_exit
      _
    %2536 = vsyncpa [#allocation4], 1
    %s2537 = scalar_lea.sflag [#allocation4], 1
    %2538 = vsyncpa %s2537, 1

</llo_original>
